<compile_context>
chip_gen: v6e
topology: v6e:2x2x1
jax: 0.10.0
libtpu: 0.0.40
codegen_flags: <defaults>
</compile_context>

<pallas_src>
import jax
import jax.numpy as jnp
import numpy as np
from jax.experimental import pallas as pl
from jax.experimental.pallas import tpu as pltpu


def _fft_loss_kernel(x_ref, t_ref, mh_ref, gw_ref, amp_ref, cos_ref):
    """One block = TB (pred, target) image pairs, batch-major (TB, H, W)."""
    tb, h, w = x_ref.shape
    wfp = gw_ref.shape[1] // 2
    f32 = jnp.float32
    eps = 1e-12

    mh = mh_ref[...]                       # (2H, H)     [[cos]; [sin]] over (u, h)
    gw = gw_ref[...]                       # (W, 2*Wfp)  [cos | sin] over (w, v), zero-padded

    # --- W-stage: shared-operand lane-contraction matmuls (no kron, no
    # corner-turn transpose): TB just rides along the M / sublane dimension.
    bx = jnp.dot(x_ref[...].reshape(tb * h, w), gw,
                 preferred_element_type=f32).reshape(tb, h, 2 * wfp)
    bt = jnp.dot(t_ref[...].reshape(tb * h, w), gw,
                 preferred_element_type=f32).reshape(tb, h, 2 * wfp)

    amp_acc = jnp.zeros((1, wfp), f32)
    cos_acc = jnp.zeros((1, wfp), f32)

    # --- H-stage + epilogue per image (static unroll): transpose-free matmuls,
    # and live f32 temporaries stay bounded to a single image's spectra.
    for b in range(tb):
        zp = jnp.dot(mh, bx[b], preferred_element_type=f32)   # (2H, 2*Wfp)
        zt = jnp.dot(mh, bt[b], preferred_element_type=f32)
        # rfft2 real/imag (the imag parts carry a global sign flip that cancels
        # in |.| and in the phase-difference cosine). Lane slices at wfp are
        # 128-aligned by construction; sublane slices at h are 8-aligned for
        # typical H (any H is still correct, just may relayout).
        pr = zp[:h, :wfp] - zp[h:, wfp:]
        pi = zp[:h, wfp:] + zp[h:, :wfp]
        tr = zt[:h, :wfp] - zt[h:, wfp:]
        ti = zt[:h, wfp:] + zt[h:, :wfp]

        p2 = pr * pr + pi * pi
        t2 = tr * tr + ti * ti
        amp = jnp.abs(jnp.sqrt(p2) - jnp.sqrt(t2))
        # cos(phase_p - phase_t) via two EUP rsqrts; avoids under/overflow of
        # the 4th-power p2*t2. Padded (zero) lanes contribute exactly 0.
        cosv = ((pr * tr + pi * ti)
                * jax.lax.rsqrt(p2 + eps) * jax.lax.rsqrt(t2 + eps))

        amp_acc = amp_acc + jnp.sum(amp, axis=0, keepdims=True)
        cos_acc = cos_acc + jnp.sum(cosv, axis=0, keepdims=True)

    amp_ref[0] = amp_acc                   # (1, Wfp) full-lane stores
    cos_ref[0] = cos_acc


def _round_up(x, m):
    return (x + m - 1) // m * m


def _chip_vmem_plan():
    """(per-block VMEM budget, vmem_limit_bytes), chip-aware with safe fallback."""
    cap = 64 << 20
    try:
        cap = int(getattr(pltpu.get_tpu_info(), "vmem_capacity_bytes", cap))
    except Exception:
        pass
    if cap >= (100 << 20):                 # v5e / v6e: 128 MiB of VMEM
        return 32 << 20, 96 << 20
    return 8 << 20, 32 << 20               # v7x-class: 64 MiB per TensorCore


def _pick_block_batch(B, H, W, Wfp, budget_bytes, max_tb=16):
    """Largest divisor of B that fits the VMEM budget, capped so the grid has
    at least two steps (keeps both TensorCores busy on multi-core parts) and
    so the static per-image unroll stays short. Never exceeds the budget."""
    cap = 1 if B == 1 else min(max(1, B // 2), max_tb)
    best = 1
    for tb in range(1, cap + 1):
        if B % tb:
            continue
        blocks = 4 * tb * H * W * 4                    # pred+target, double-buffered
        consts = 2 * (2 * H * H + 2 * W * Wfp) * 4     # mh + gw, double-buffered
        interm = (4 * tb * H * Wfp + 2 * tb * H * W + 16 * H * Wfp) * 4
        if blocks + consts + interm <= budget_bytes:
            best = tb
    return best


def fft_loss_v1(pred, target, loss_weight=0.1):
    """Pallas implementation of FFTLossv1.forward (reduction='mean')."""
    N, C, H, W = pred.shape
    B = N * C
    Wf = W // 2 + 1
    Wfp = _round_up(Wf, 128)               # lane-aligned cos/sin halves + dense stores
    budget, vmem_limit = _chip_vmem_plan()
    TB = _pick_block_batch(B, H, W, Wfp, budget)
    nb = B // TB

    # Free reshape only -- no wrapper-side transpose / extra HBM round trip.
    p = pred.reshape(B, H, W).astype(jnp.float32)
    t = target.reshape(B, H, W).astype(jnp.float32)

    # Dense DFT operands (host constants; shared across images -- no kron).
    hh = np.arange(H, dtype=np.float64)
    ah = 2.0 * np.pi * np.outer(hh, hh) / H
    mh = np.concatenate([np.cos(ah), np.sin(ah)], axis=0).astype(np.float32)   # (2H, H)

    ww = np.arange(W, dtype=np.float64)
    vv = np.arange(Wf, dtype=np.float64)
    aw = 2.0 * np.pi * np.outer(ww, vv) / W
    cw = np.zeros((W, Wfp), np.float32)
    sw = np.zeros((W, Wfp), np.float32)
    cw[:, :Wf] = np.cos(aw)
    sw[:, :Wf] = np.sin(aw)
    gw = np.concatenate([cw, sw], axis=1)                                       # (W, 2*Wfp)

    amp_p, cos_p = pl.pallas_call(
        _fft_loss_kernel,
        out_shape=(jax.ShapeDtypeStruct((nb, 1, Wfp), jnp.float32),
                   jax.ShapeDtypeStruct((nb, 1, Wfp), jnp.float32)),
        grid_spec=pltpu.PrefetchScalarGridSpec(
            num_scalar_prefetch=0,
            grid=(nb,),
            in_specs=[
                pl.BlockSpec((TB, H, W), lambda b: (b, 0, 0)),      # pred block
                pl.BlockSpec((TB, H, W), lambda b: (b, 0, 0)),      # target block
                pl.BlockSpec((2 * H, H), lambda b: (0, 0)),         # [[Ch]; [Sh]]
                pl.BlockSpec((W, 2 * Wfp), lambda b: (0, 0)),       # [Cw | Sw] (padded)
            ],
            out_specs=[
                pl.BlockSpec((1, 1, Wfp), lambda b: (b, 0, 0)),     # amp lane partials
                pl.BlockSpec((1, 1, Wfp), lambda b: (b, 0, 0)),     # cos lane partials
            ],
        ),
        compiler_params=pltpu.CompilerParams(
            dimension_semantics=("parallel",),
            vmem_limit_bytes=vmem_limit),
    )(p, t, jnp.asarray(mh), jnp.asarray(gw))

    count = B * H * Wf                     # number of rfft2 output bins
    amp_loss = jnp.sum(amp_p[..., :Wf]) / count
    phase_loss = 1.0 - jnp.sum(cos_p[..., :Wf]) / count
    return loss_weight * (amp_loss + 0.5 * phase_loss)


def fft_loss_v1_ref(pred, target, loss_weight=0.1):
    """Pure-JAX reference mirroring the PyTorch module."""
    pf = jnp.fft.rfft2(pred)
    tf = jnp.fft.rfft2(target)
    amp_loss = jnp.mean(jnp.abs(jnp.abs(pf) - jnp.abs(tf)))
    phase_loss = 1.0 - jnp.mean(jnp.cos(jnp.angle(pf) - jnp.angle(tf)))
    return loss_weight * (amp_loss + 0.5 * phase_loss)


if __name__ == "__main__":
    key = jax.random.PRNGKey(0)
    k1, k2 = jax.random.split(key)
    N, C, H, W = 2, 4, 16, 16
    pred = jax.random.normal(k1, (N, C, H, W), dtype=jnp.float32)
    target = jax.random.normal(k2, (N, C, H, W), dtype=jnp.float32)

    loss = jax.block_until_ready(fft_loss_v1(pred, target, loss_weight=0.1))
    ref = jax.block_until_ready(fft_loss_v1_ref(pred, target, loss_weight=0.1))

    # Tolerance accounts for DEFAULT (1-pass bf16) MXU precision per the perf
    # review; the loss-level error at this shape is ~0.3% in practice.
    np.testing.assert_allclose(np.asarray(loss), np.asarray(ref),
                               rtol=2e-2, atol=2e-3)
    print("KERNEL_OK")
</pallas_src>

<mosaic_0001>
module attributes {stable_mosaic.version = 11 : i64} {
  func.func @_fft_loss_kernel(%arg0: i32, %arg1: memref<4x16x16xf32, #tpu.memory_space<vmem>>, %arg2: memref<4x16x16xf32, #tpu.memory_space<vmem>>, %arg3: memref<32x16xf32, #tpu.memory_space<vmem>>, %arg4: memref<16x256xf32, #tpu.memory_space<vmem>>, %arg5: memref<1x1x128xf32, #tpu.memory_space<vmem>>, %arg6: memref<1x1x128xf32, #tpu.memory_space<vmem>>) attributes {dimension_semantics = [#tpu.dimension_semantics<parallel>], iteration_bounds = array<i64: 2>, scalar_prefetch = 0 : i64, scratch_operands = 0 : i64, tpu.core_type = #tpu.core_type<tc>, window_params = [{transform_indices = @transform_0, window_bounds = array<i64: 4, 16, 16>}, {transform_indices = @transform_1, window_bounds = array<i64: 4, 16, 16>}, {pipeline_mode = #tpu.pipeline_mode<synchronous>, transform_indices = @transform_2, window_bounds = array<i64: 32, 16>}, {pipeline_mode = #tpu.pipeline_mode<synchronous>, transform_indices = @transform_3, window_bounds = array<i64: 16, 256>}, {transform_indices = @transform_4, window_bounds = array<i64: 1, 1, 128>}, {transform_indices = @transform_5, window_bounds = array<i64: 1, 1, 128>}]} {
    %c0 = arith.constant 0 : index
    %c0_0 = arith.constant 0 : index
    %0 = vector.load %arg3[%c0, %c0_0] : memref<32x16xf32, #tpu.memory_space<vmem>>, vector<32x16xf32>
    %c0_1 = arith.constant 0 : index
    %c0_2 = arith.constant 0 : index
    %1 = vector.load %arg4[%c0_1, %c0_2] : memref<16x256xf32, #tpu.memory_space<vmem>>, vector<16x256xf32>
    %c0_3 = arith.constant 0 : index
    %c0_4 = arith.constant 0 : index
    %c0_5 = arith.constant 0 : index
    %2 = vector.load %arg1[%c0_3, %c0_4, %c0_5] : memref<4x16x16xf32, #tpu.memory_space<vmem>>, vector<4x16x16xf32>
    %3 = vector.shape_cast %2 : vector<4x16x16xf32> to vector<64x16xf32>
    %cst = arith.constant dense<0.000000e+00> : vector<64x256xf32>
    %4 = tpu.matmul %3, %1, %cst {dimension_numbers = #tpu.dot_dimension_numbers<[1], [0], [0], [1], [0, 0, 1, 1], [], []>} : vector<64x16xf32>, vector<16x256xf32>, vector<64x256xf32> -> vector<64x256xf32>
    %5 = vector.shape_cast %4 : vector<64x256xf32> to vector<4x16x256xf32>
    %c0_6 = arith.constant 0 : index
    %c0_7 = arith.constant 0 : index
    %c0_8 = arith.constant 0 : index
    %6 = vector.load %arg2[%c0_6, %c0_7, %c0_8] : memref<4x16x16xf32, #tpu.memory_space<vmem>>, vector<4x16x16xf32>
    %7 = vector.shape_cast %6 : vector<4x16x16xf32> to vector<64x16xf32>
    %cst_9 = arith.constant dense<0.000000e+00> : vector<64x256xf32>
    %8 = tpu.matmul %7, %1, %cst_9 {dimension_numbers = #tpu.dot_dimension_numbers<[1], [0], [0], [1], [0, 0, 1, 1], [], []>} : vector<64x16xf32>, vector<16x256xf32>, vector<64x256xf32> -> vector<64x256xf32>
    %9 = vector.shape_cast %8 : vector<64x256xf32> to vector<4x16x256xf32>
    %cst_10 = arith.constant 0.000000e+00 : f32
    %10 = vector.broadcast %cst_10 : f32 to vector<1x128xf32>
    %cst_11 = arith.constant 0.000000e+00 : f32
    %11 = vector.broadcast %cst_11 : f32 to vector<1x128xf32>
    %12 = vector.extract_strided_slice %5 {offsets = [0, 0, 0], sizes = [1, 16, 256], strides = [1, 1, 1]} : vector<4x16x256xf32> to vector<1x16x256xf32>
    %13 = vector.shape_cast %12 : vector<1x16x256xf32> to vector<16x256xf32>
    %cst_12 = arith.constant dense<0.000000e+00> : vector<32x256xf32>
    %14 = tpu.matmul %0, %13, %cst_12 {dimension_numbers = #tpu.dot_dimension_numbers<[1], [0], [0], [1], [0, 0, 1, 1], [], []>} : vector<32x16xf32>, vector<16x256xf32>, vector<32x256xf32> -> vector<32x256xf32>
    %15 = vector.extract_strided_slice %9 {offsets = [0, 0, 0], sizes = [1, 16, 256], strides = [1, 1, 1]} : vector<4x16x256xf32> to vector<1x16x256xf32>
    %16 = vector.shape_cast %15 : vector<1x16x256xf32> to vector<16x256xf32>
    %cst_13 = arith.constant dense<0.000000e+00> : vector<32x256xf32>
    %17 = tpu.matmul %0, %16, %cst_13 {dimension_numbers = #tpu.dot_dimension_numbers<[1], [0], [0], [1], [0, 0, 1, 1], [], []>} : vector<32x16xf32>, vector<16x256xf32>, vector<32x256xf32> -> vector<32x256xf32>
    %18 = vector.extract_strided_slice %14 {offsets = [0, 0], sizes = [16, 128], strides = [1, 1]} : vector<32x256xf32> to vector<16x128xf32>
    %19 = vector.extract_strided_slice %14 {offsets = [16, 128], sizes = [16, 128], strides = [1, 1]} : vector<32x256xf32> to vector<16x128xf32>
    %20 = arith.subf %18, %19 : vector<16x128xf32>
    %21 = vector.extract_strided_slice %14 {offsets = [0, 128], sizes = [16, 128], strides = [1, 1]} : vector<32x256xf32> to vector<16x128xf32>
    %22 = vector.extract_strided_slice %14 {offsets = [16, 0], sizes = [16, 128], strides = [1, 1]} : vector<32x256xf32> to vector<16x128xf32>
    %23 = arith.addf %21, %22 : vector<16x128xf32>
    %24 = vector.extract_strided_slice %17 {offsets = [0, 0], sizes = [16, 128], strides = [1, 1]} : vector<32x256xf32> to vector<16x128xf32>
    %25 = vector.extract_strided_slice %17 {offsets = [16, 128], sizes = [16, 128], strides = [1, 1]} : vector<32x256xf32> to vector<16x128xf32>
    %26 = arith.subf %24, %25 : vector<16x128xf32>
    %27 = vector.extract_strided_slice %17 {offsets = [0, 128], sizes = [16, 128], strides = [1, 1]} : vector<32x256xf32> to vector<16x128xf32>
    %28 = vector.extract_strided_slice %17 {offsets = [16, 0], sizes = [16, 128], strides = [1, 1]} : vector<32x256xf32> to vector<16x128xf32>
    %29 = arith.addf %27, %28 : vector<16x128xf32>
    %30 = arith.mulf %20, %20 : vector<16x128xf32>
    %31 = arith.mulf %23, %23 : vector<16x128xf32>
    %32 = arith.addf %30, %31 : vector<16x128xf32>
    %33 = arith.mulf %26, %26 : vector<16x128xf32>
    %34 = arith.mulf %29, %29 : vector<16x128xf32>
    %35 = arith.addf %33, %34 : vector<16x128xf32>
    %36 = math.sqrt %32 : vector<16x128xf32>
    %37 = math.sqrt %35 : vector<16x128xf32>
    %38 = arith.subf %36, %37 : vector<16x128xf32>
    %39 = math.absf %38 : vector<16x128xf32>
    %40 = arith.mulf %20, %26 : vector<16x128xf32>
    %41 = arith.mulf %23, %29 : vector<16x128xf32>
    %42 = arith.addf %40, %41 : vector<16x128xf32>
    %cst_14 = arith.constant 9.99999996E-13 : f32
    %43 = vector.broadcast %cst_14 : f32 to vector<16x128xf32>
    %44 = arith.addf %32, %43 : vector<16x128xf32>
    %45 = math.rsqrt %44 : vector<16x128xf32>
    %46 = arith.mulf %42, %45 : vector<16x128xf32>
    %cst_15 = arith.constant 9.99999996E-13 : f32
    %47 = vector.broadcast %cst_15 : f32 to vector<16x128xf32>
    %48 = arith.addf %35, %47 : vector<16x128xf32>
    %49 = math.rsqrt %48 : vector<16x128xf32>
    %50 = arith.mulf %46, %49 : vector<16x128xf32>
    %cst_16 = arith.constant dense<0.000000e+00> : vector<128xf32>
    %51 = vector.multi_reduction <add>, %39, %cst_16 [0] : vector<16x128xf32> to vector<128xf32>
    %52 = vector.shape_cast %51 : vector<128xf32> to vector<1x128xf32>
    %53 = arith.addf %10, %52 : vector<1x128xf32>
    %cst_17 = arith.constant dense<0.000000e+00> : vector<128xf32>
    %54 = vector.multi_reduction <add>, %50, %cst_17 [0] : vector<16x128xf32> to vector<128xf32>
    %55 = vector.shape_cast %54 : vector<128xf32> to vector<1x128xf32>
    %56 = arith.addf %11, %55 : vector<1x128xf32>
    %57 = vector.extract_strided_slice %5 {offsets = [1, 0, 0], sizes = [1, 16, 256], strides = [1, 1, 1]} : vector<4x16x256xf32> to vector<1x16x256xf32>
    %58 = vector.shape_cast %57 : vector<1x16x256xf32> to vector<16x256xf32>
    %cst_18 = arith.constant dense<0.000000e+00> : vector<32x256xf32>
    %59 = tpu.matmul %0, %58, %cst_18 {dimension_numbers = #tpu.dot_dimension_numbers<[1], [0], [0], [1], [0, 0, 1, 1], [], []>} : vector<32x16xf32>, vector<16x256xf32>, vector<32x256xf32> -> vector<32x256xf32>
    %60 = vector.extract_strided_slice %9 {offsets = [1, 0, 0], sizes = [1, 16, 256], strides = [1, 1, 1]} : vector<4x16x256xf32> to vector<1x16x256xf32>
    %61 = vector.shape_cast %60 : vector<1x16x256xf32> to vector<16x256xf32>
    %cst_19 = arith.constant dense<0.000000e+00> : vector<32x256xf32>
    %62 = tpu.matmul %0, %61, %cst_19 {dimension_numbers = #tpu.dot_dimension_numbers<[1], [0], [0], [1], [0, 0, 1, 1], [], []>} : vector<32x16xf32>, vector<16x256xf32>, vector<32x256xf32> -> vector<32x256xf32>
    %63 = vector.extract_strided_slice %59 {offsets = [0, 0], sizes = [16, 128], strides = [1, 1]} : vector<32x256xf32> to vector<16x128xf32>
    %64 = vector.extract_strided_slice %59 {offsets = [16, 128], sizes = [16, 128], strides = [1, 1]} : vector<32x256xf32> to vector<16x128xf32>
    %65 = arith.subf %63, %64 : vector<16x128xf32>
    %66 = vector.extract_strided_slice %59 {offsets = [0, 128], sizes = [16, 128], strides = [1, 1]} : vector<32x256xf32> to vector<16x128xf32>
    %67 = vector.extract_strided_slice %59 {offsets = [16, 0], sizes = [16, 128], strides = [1, 1]} : vector<32x256xf32> to vector<16x128xf32>
    %68 = arith.addf %66, %67 : vector<16x128xf32>
    %69 = vector.extract_strided_slice %62 {offsets = [0, 0], sizes = [16, 128], strides = [1, 1]} : vector<32x256xf32> to vector<16x128xf32>
    %70 = vector.extract_strided_slice %62 {offsets = [16, 128], sizes = [16, 128], strides = [1, 1]} : vector<32x256xf32> to vector<16x128xf32>
    %71 = arith.subf %69, %70 : vector<16x128xf32>
    %72 = vector.extract_strided_slice %62 {offsets = [0, 128], sizes = [16, 128], strides = [1, 1]} : vector<32x256xf32> to vector<16x128xf32>
    %73 = vector.extract_strided_slice %62 {offsets = [16, 0], sizes = [16, 128], strides = [1, 1]} : vector<32x256xf32> to vector<16x128xf32>
    %74 = arith.addf %72, %73 : vector<16x128xf32>
    %75 = arith.mulf %65, %65 : vector<16x128xf32>
    %76 = arith.mulf %68, %68 : vector<16x128xf32>
    %77 = arith.addf %75, %76 : vector<16x128xf32>
    %78 = arith.mulf %71, %71 : vector<16x128xf32>
    %79 = arith.mulf %74, %74 : vector<16x128xf32>
    %80 = arith.addf %78, %79 : vector<16x128xf32>
    %81 = math.sqrt %77 : vector<16x128xf32>
    %82 = math.sqrt %80 : vector<16x128xf32>
    %83 = arith.subf %81, %82 : vector<16x128xf32>
    %84 = math.absf %83 : vector<16x128xf32>
    %85 = arith.mulf %65, %71 : vector<16x128xf32>
    %86 = arith.mulf %68, %74 : vector<16x128xf32>
    %87 = arith.addf %85, %86 : vector<16x128xf32>
    %cst_20 = arith.constant 9.99999996E-13 : f32
    %88 = vector.broadcast %cst_20 : f32 to vector<16x128xf32>
    %89 = arith.addf %77, %88 : vector<16x128xf32>
    %90 = math.rsqrt %89 : vector<16x128xf32>
    %91 = arith.mulf %87, %90 : vector<16x128xf32>
    %cst_21 = arith.constant 9.99999996E-13 : f32
    %92 = vector.broadcast %cst_21 : f32 to vector<16x128xf32>
    %93 = arith.addf %80, %92 : vector<16x128xf32>
    %94 = math.rsqrt %93 : vector<16x128xf32>
    %95 = arith.mulf %91, %94 : vector<16x128xf32>
    %cst_22 = arith.constant dense<0.000000e+00> : vector<128xf32>
    %96 = vector.multi_reduction <add>, %84, %cst_22 [0] : vector<16x128xf32> to vector<128xf32>
    %97 = vector.shape_cast %96 : vector<128xf32> to vector<1x128xf32>
    %98 = arith.addf %53, %97 : vector<1x128xf32>
    %cst_23 = arith.constant dense<0.000000e+00> : vector<128xf32>
    %99 = vector.multi_reduction <add>, %95, %cst_23 [0] : vector<16x128xf32> to vector<128xf32>
    %100 = vector.shape_cast %99 : vector<128xf32> to vector<1x128xf32>
    %101 = arith.addf %56, %100 : vector<1x128xf32>
    %102 = vector.extract_strided_slice %5 {offsets = [2, 0, 0], sizes = [1, 16, 256], strides = [1, 1, 1]} : vector<4x16x256xf32> to vector<1x16x256xf32>
    %103 = vector.shape_cast %102 : vector<1x16x256xf32> to vector<16x256xf32>
    %cst_24 = arith.constant dense<0.000000e+00> : vector<32x256xf32>
    %104 = tpu.matmul %0, %103, %cst_24 {dimension_numbers = #tpu.dot_dimension_numbers<[1], [0], [0], [1], [0, 0, 1, 1], [], []>} : vector<32x16xf32>, vector<16x256xf32>, vector<32x256xf32> -> vector<32x256xf32>
    %105 = vector.extract_strided_slice %9 {offsets = [2, 0, 0], sizes = [1, 16, 256], strides = [1, 1, 1]} : vector<4x16x256xf32> to vector<1x16x256xf32>
    %106 = vector.shape_cast %105 : vector<1x16x256xf32> to vector<16x256xf32>
    %cst_25 = arith.constant dense<0.000000e+00> : vector<32x256xf32>
    %107 = tpu.matmul %0, %106, %cst_25 {dimension_numbers = #tpu.dot_dimension_numbers<[1], [0], [0], [1], [0, 0, 1, 1], [], []>} : vector<32x16xf32>, vector<16x256xf32>, vector<32x256xf32> -> vector<32x256xf32>
    %108 = vector.extract_strided_slice %104 {offsets = [0, 0], sizes = [16, 128], strides = [1, 1]} : vector<32x256xf32> to vector<16x128xf32>
    %109 = vector.extract_strided_slice %104 {offsets = [16, 128], sizes = [16, 128], strides = [1, 1]} : vector<32x256xf32> to vector<16x128xf32>
    %110 = arith.subf %108, %109 : vector<16x128xf32>
    %111 = vector.extract_strided_slice %104 {offsets = [0, 128], sizes = [16, 128], strides = [1, 1]} : vector<32x256xf32> to vector<16x128xf32>
    %112 = vector.extract_strided_slice %104 {offsets = [16, 0], sizes = [16, 128], strides = [1, 1]} : vector<32x256xf32> to vector<16x128xf32>
    %113 = arith.addf %111, %112 : vector<16x128xf32>
    %114 = vector.extract_strided_slice %107 {offsets = [0, 0], sizes = [16, 128], strides = [1, 1]} : vector<32x256xf32> to vector<16x128xf32>
    %115 = vector.extract_strided_slice %107 {offsets = [16, 128], sizes = [16, 128], strides = [1, 1]} : vector<32x256xf32> to vector<16x128xf32>
    %116 = arith.subf %114, %115 : vector<16x128xf32>
    %117 = vector.extract_strided_slice %107 {offsets = [0, 128], sizes = [16, 128], strides = [1, 1]} : vector<32x256xf32> to vector<16x128xf32>
    %118 = vector.extract_strided_slice %107 {offsets = [16, 0], sizes = [16, 128], strides = [1, 1]} : vector<32x256xf32> to vector<16x128xf32>
    %119 = arith.addf %117, %118 : vector<16x128xf32>
    %120 = arith.mulf %110, %110 : vector<16x128xf32>
    %121 = arith.mulf %113, %113 : vector<16x128xf32>
    %122 = arith.addf %120, %121 : vector<16x128xf32>
    %123 = arith.mulf %116, %116 : vector<16x128xf32>
    %124 = arith.mulf %119, %119 : vector<16x128xf32>
    %125 = arith.addf %123, %124 : vector<16x128xf32>
    %126 = math.sqrt %122 : vector<16x128xf32>
    %127 = math.sqrt %125 : vector<16x128xf32>
    %128 = arith.subf %126, %127 : vector<16x128xf32>
    %129 = math.absf %128 : vector<16x128xf32>
    %130 = arith.mulf %110, %116 : vector<16x128xf32>
    %131 = arith.mulf %113, %119 : vector<16x128xf32>
    %132 = arith.addf %130, %131 : vector<16x128xf32>
    %cst_26 = arith.constant 9.99999996E-13 : f32
    %133 = vector.broadcast %cst_26 : f32 to vector<16x128xf32>
    %134 = arith.addf %122, %133 : vector<16x128xf32>
    %135 = math.rsqrt %134 : vector<16x128xf32>
    %136 = arith.mulf %132, %135 : vector<16x128xf32>
    %cst_27 = arith.constant 9.99999996E-13 : f32
    %137 = vector.broadcast %cst_27 : f32 to vector<16x128xf32>
    %138 = arith.addf %125, %137 : vector<16x128xf32>
    %139 = math.rsqrt %138 : vector<16x128xf32>
    %140 = arith.mulf %136, %139 : vector<16x128xf32>
    %cst_28 = arith.constant dense<0.000000e+00> : vector<128xf32>
    %141 = vector.multi_reduction <add>, %129, %cst_28 [0] : vector<16x128xf32> to vector<128xf32>
    %142 = vector.shape_cast %141 : vector<128xf32> to vector<1x128xf32>
    %143 = arith.addf %98, %142 : vector<1x128xf32>
    %cst_29 = arith.constant dense<0.000000e+00> : vector<128xf32>
    %144 = vector.multi_reduction <add>, %140, %cst_29 [0] : vector<16x128xf32> to vector<128xf32>
    %145 = vector.shape_cast %144 : vector<128xf32> to vector<1x128xf32>
    %146 = arith.addf %101, %145 : vector<1x128xf32>
    %147 = vector.extract_strided_slice %5 {offsets = [3, 0, 0], sizes = [1, 16, 256], strides = [1, 1, 1]} : vector<4x16x256xf32> to vector<1x16x256xf32>
    %148 = vector.shape_cast %147 : vector<1x16x256xf32> to vector<16x256xf32>
    %cst_30 = arith.constant dense<0.000000e+00> : vector<32x256xf32>
    %149 = tpu.matmul %0, %148, %cst_30 {dimension_numbers = #tpu.dot_dimension_numbers<[1], [0], [0], [1], [0, 0, 1, 1], [], []>} : vector<32x16xf32>, vector<16x256xf32>, vector<32x256xf32> -> vector<32x256xf32>
    %150 = vector.extract_strided_slice %9 {offsets = [3, 0, 0], sizes = [1, 16, 256], strides = [1, 1, 1]} : vector<4x16x256xf32> to vector<1x16x256xf32>
    %151 = vector.shape_cast %150 : vector<1x16x256xf32> to vector<16x256xf32>
    %cst_31 = arith.constant dense<0.000000e+00> : vector<32x256xf32>
    %152 = tpu.matmul %0, %151, %cst_31 {dimension_numbers = #tpu.dot_dimension_numbers<[1], [0], [0], [1], [0, 0, 1, 1], [], []>} : vector<32x16xf32>, vector<16x256xf32>, vector<32x256xf32> -> vector<32x256xf32>
    %153 = vector.extract_strided_slice %149 {offsets = [0, 0], sizes = [16, 128], strides = [1, 1]} : vector<32x256xf32> to vector<16x128xf32>
    %154 = vector.extract_strided_slice %149 {offsets = [16, 128], sizes = [16, 128], strides = [1, 1]} : vector<32x256xf32> to vector<16x128xf32>
    %155 = arith.subf %153, %154 : vector<16x128xf32>
    %156 = vector.extract_strided_slice %149 {offsets = [0, 128], sizes = [16, 128], strides = [1, 1]} : vector<32x256xf32> to vector<16x128xf32>
    %157 = vector.extract_strided_slice %149 {offsets = [16, 0], sizes = [16, 128], strides = [1, 1]} : vector<32x256xf32> to vector<16x128xf32>
    %158 = arith.addf %156, %157 : vector<16x128xf32>
    %159 = vector.extract_strided_slice %152 {offsets = [0, 0], sizes = [16, 128], strides = [1, 1]} : vector<32x256xf32> to vector<16x128xf32>
    %160 = vector.extract_strided_slice %152 {offsets = [16, 128], sizes = [16, 128], strides = [1, 1]} : vector<32x256xf32> to vector<16x128xf32>
    %161 = arith.subf %159, %160 : vector<16x128xf32>
    %162 = vector.extract_strided_slice %152 {offsets = [0, 128], sizes = [16, 128], strides = [1, 1]} : vector<32x256xf32> to vector<16x128xf32>
    %163 = vector.extract_strided_slice %152 {offsets = [16, 0], sizes = [16, 128], strides = [1, 1]} : vector<32x256xf32> to vector<16x128xf32>
    %164 = arith.addf %162, %163 : vector<16x128xf32>
    %165 = arith.mulf %155, %155 : vector<16x128xf32>
    %166 = arith.mulf %158, %158 : vector<16x128xf32>
    %167 = arith.addf %165, %166 : vector<16x128xf32>
    %168 = arith.mulf %161, %161 : vector<16x128xf32>
    %169 = arith.mulf %164, %164 : vector<16x128xf32>
    %170 = arith.addf %168, %169 : vector<16x128xf32>
    %171 = math.sqrt %167 : vector<16x128xf32>
    %172 = math.sqrt %170 : vector<16x128xf32>
    %173 = arith.subf %171, %172 : vector<16x128xf32>
    %174 = math.absf %173 : vector<16x128xf32>
    %175 = arith.mulf %155, %161 : vector<16x128xf32>
    %176 = arith.mulf %158, %164 : vector<16x128xf32>
    %177 = arith.addf %175, %176 : vector<16x128xf32>
    %cst_32 = arith.constant 9.99999996E-13 : f32
    %178 = vector.broadcast %cst_32 : f32 to vector<16x128xf32>
    %179 = arith.addf %167, %178 : vector<16x128xf32>
    %180 = math.rsqrt %179 : vector<16x128xf32>
    %181 = arith.mulf %177, %180 : vector<16x128xf32>
    %cst_33 = arith.constant 9.99999996E-13 : f32
    %182 = vector.broadcast %cst_33 : f32 to vector<16x128xf32>
    %183 = arith.addf %170, %182 : vector<16x128xf32>
    %184 = math.rsqrt %183 : vector<16x128xf32>
    %185 = arith.mulf %181, %184 : vector<16x128xf32>
    %cst_34 = arith.constant dense<0.000000e+00> : vector<128xf32>
    %186 = vector.multi_reduction <add>, %174, %cst_34 [0] : vector<16x128xf32> to vector<128xf32>
    %187 = vector.shape_cast %186 : vector<128xf32> to vector<1x128xf32>
    %188 = arith.addf %143, %187 : vector<1x128xf32>
    %cst_35 = arith.constant dense<0.000000e+00> : vector<128xf32>
    %189 = vector.multi_reduction <add>, %185, %cst_35 [0] : vector<16x128xf32> to vector<128xf32>
    %190 = vector.shape_cast %189 : vector<128xf32> to vector<1x128xf32>
    %191 = arith.addf %146, %190 : vector<1x128xf32>
    %c0_36 = arith.constant 0 : index
    %c0_37 = arith.constant 0 : index
    %c0_38 = arith.constant 0 : index
    %192 = vector.load %arg5[%c0_36, %c0_37, %c0_38] : memref<1x1x128xf32, #tpu.memory_space<vmem>>, vector<1x1x128xf32>
    %193 = vector.shape_cast %192 : vector<1x1x128xf32> to vector<1x128xf32>
    %194 = vector.shape_cast %188 : vector<1x128xf32> to vector<1x1x128xf32>
    tpu.vector_store %arg5[%c0_36, %c0_37, %c0_38], %194 {strides = array<i32>} : memref<1x1x128xf32, #tpu.memory_space<vmem>>, vector<1x1x128xf32>,
    %c0_39 = arith.constant 0 : index
    %c0_40 = arith.constant 0 : index
    %c0_41 = arith.constant 0 : index
    %195 = vector.load %arg6[%c0_39, %c0_40, %c0_41] : memref<1x1x128xf32, #tpu.memory_space<vmem>>, vector<1x1x128xf32>
    %196 = vector.shape_cast %195 : vector<1x1x128xf32> to vector<1x128xf32>
    %197 = vector.shape_cast %191 : vector<1x128xf32> to vector<1x1x128xf32>
    tpu.vector_store %arg6[%c0_39, %c0_40, %c0_41], %197 {strides = array<i32>} : memref<1x1x128xf32, #tpu.memory_space<vmem>>, vector<1x1x128xf32>,
    return
  }
  func.func @transform_0(%arg0: i32) -> (i32, i32, i32) {
    %c0_i32 = arith.constant 0 : i32
    %c0_i32_0 = arith.constant 0 : i32
    %c0_i32_1 = arith.constant 0 : i32
    return %arg0, %c0_i32, %c0_i32_0 : i32, i32, i32
  }
  func.func @transform_1(%arg0: i32) -> (i32, i32, i32) {
    %c0_i32 = arith.constant 0 : i32
    %c0_i32_0 = arith.constant 0 : i32
    %c0_i32_1 = arith.constant 0 : i32
    return %arg0, %c0_i32, %c0_i32_0 : i32, i32, i32
  }
  func.func @transform_2(%arg0: i32) -> (i32, i32) {
    %c0_i32 = arith.constant 0 : i32
    %c0_i32_0 = arith.constant 0 : i32
    %c0_i32_1 = arith.constant 0 : i32
    return %c0_i32, %c0_i32_0 : i32, i32
  }
  func.func @transform_3(%arg0: i32) -> (i32, i32) {
    %c0_i32 = arith.constant 0 : i32
    %c0_i32_0 = arith.constant 0 : i32
    %c0_i32_1 = arith.constant 0 : i32
    return %c0_i32, %c0_i32_0 : i32, i32
  }
  func.func @transform_4(%arg0: i32) -> (i32, i32, i32) {
    %c0_i32 = arith.constant 0 : i32
    %c0_i32_0 = arith.constant 0 : i32
    %c0_i32_1 = arith.constant 0 : i32
    return %arg0, %c0_i32, %c0_i32_0 : i32, i32, i32
  }
  func.func @transform_5(%arg0: i32) -> (i32, i32, i32) {
    %c0_i32 = arith.constant 0 : i32
    %c0_i32_0 = arith.constant 0 : i32
    %c0_i32_1 = arith.constant 0 : i32
    return %arg0, %c0_i32, %c0_i32_0 : i32, i32, i32
  }
}

</mosaic_0001>

<llo_original>
// kernel: tpu_custom_call.1
$region0: #{tpu_custom_call.1}
  #allocation0 [shape = 'u32[]', space=smem, size = 0x4, offset = 0x4, fixed_abs, tag = 'smem constant byte address 0x4 - core index']
  #allocation1 [shape = 'u32[144,128]{1,0:T(1,128)}', space=vmem, size = 0x12000, scoped, tag = 'internal scratch']
  %s0 = inlined_call_operand.hbm [shape: f32[8,16,16], index: 0, kind: input, shape index: {}]
  %s1 = inlined_call_operand.hbm [shape: f32[8,16,16], index: 1, kind: input, shape index: {}]
  %s2 = inlined_call_operand.vmem [shape: f32[32,16], index: 2, kind: input, shape index: {}]
  %s3 = inlined_call_operand.vmem [shape: f32[16,256], index: 3, kind: input, shape index: {}]
  %s4 = inlined_call_operand.hbm [shape: f32[2,1,128], index: 4, kind: output, shape index: {0}]
  %s5 = inlined_call_operand.hbm [shape: f32[2,1,128], index: 5, kind: output, shape index: {1}]
  %6 = xla_tuple %s4, %s5
  %s7 = sld [smem:[#allocation0]]
  $region65: #{tpu_custom_call.1} parent=0
    _
  %s9 = ssub.s32 1, %s7
  %s10 = scalar_select 0, %s9, %s7
  $region1: #{tpu_custom_call.1} parent=0
    #allocation2 [shape = 'u8[65536]{0}', space=vmem, size = 0x10000, scoped, tag = 'input window, operand 0']
    #allocation3 [shape = 's32[2]{0}', space=sflag, size = 0x8, scoped, tag = 'scoped memory for tpu_custom_call.1']
    #allocation4 [shape = 's32[2]{0}', space=sflag, size = 0x8, scoped, tag = 'scoped memory for tpu_custom_call.1']
    #allocation5 [shape = 'u8[65536]{0}', space=vmem, size = 0x10000, scoped, tag = 'input window, operand 1']
    #allocation6 [shape = 's32[2]{0}', space=sflag, size = 0x8, scoped, tag = 'scoped memory for tpu_custom_call.1']
    #allocation7 [shape = 'u8[1024]{0}', space=vmem, size = 0x400, scoped, tag = 'output window, operand 0']
    #allocation8 [shape = 'u8[1024]{0}', space=vmem, size = 0x400, scoped, tag = 'output window, operand 1']
    #allocation9 [shape = 's32[2]{0}', space=sflag, size = 0x8, scoped, tag = 'scoped memory for tpu_custom_call.1']
    %11 = vsyncpa [#allocation3], 0
    %s12 = scalar_lea.sflag [#allocation3], 1
    %13 = vsyncpa %s12, 0
    %14 = vsyncpa [#allocation6], 0
    %s15 = scalar_lea.sflag [#allocation6], 1
    %16 = vsyncpa %s15, 0
    %17 = vsyncpa [#allocation4], 0
    %s18 = scalar_lea.sflag [#allocation4], 1
    %19 = vsyncpa %s18, 0
    %20 = vsyncpa [#allocation9], 0
    %s21 = scalar_lea.sflag [#allocation9], 1
    %22 = vsyncpa %s21, 0
    loop: start=0, step=1, limit=4
    $region2: #{tpu_custom_call.1} parent=1 // loop_pre_header
      _
    $region3: #{tpu_custom_call.1} parent=1 // loop_header
      %s24 = sphi 0, %s28
      %p25 = scmp.ge.s32.totalorder %s24, 4
      %s34 = sphi 0, %s36
      %s37 = sphi 0, %s34
      %s38 = sphi 0, %s37
      %s54 = sphi 0, %s38
      %s60 = sphi 0, %s62
      %s63 = sphi 0, %s60
      %s64 = sphi 0, %s63
      %s80 = sphi 0, %s64
      %s84 = sphi 0, %s84
      %s86 = sphi 0, %s84
      %s87 = sphi 0, %s86
      %s101 = sphi 0, %s87
      %s105 = sphi 0, %s105
      %s107 = sphi 0, %s105
      %s108 = sphi 0, %s107
      %s122 = sphi 0, %s108
      %s128 = sphi 0, %s130
      %s131 = sphi 0, %s128
      %s132 = sphi 0, %s131
      %s148 = sphi 0, %s132
      %s154 = sphi 0, %s156
      %s157 = sphi 0, %s154
      %s158 = sphi 0, %s157
      %s174 = sphi 0, %s158
    $region4: #{tpu_custom_call.1} parent=1 // loop_header_branch
      %27 = sbr.rel (%p25) target = $region8
    $region5: #{tpu_custom_call.1} parent=1 // loop_body
      %s29 = ssub.s32 %s24, 1
      %s30 = ssub.s32 %s24, 2
      %s31 = sadd.s32 %s24, 1
      %s32 = ssub.s32 %s24, %s31
      %p33 = scmp.eq.s32.totalorder %s32, 0
      %s35 = sadd.s32 %s34, 1
      %s36 = scalar_select %p33, %s34, %s35
      %p39 = pneg %p33
      %p40 = scmp.eq.s32.totalorder %s24, 1
      %p41 = por %p39, %p40
      %p42 = scmp.ne.s32.totalorder %s34, %s37
      %p43 = scmp.eq.s32.totalorder %s24, 0
      %p44 = por %p42, %p43
      %p45 = scmp.ne.s32.totalorder %s34, %s37
      %p46 = scmp.eq.s32.totalorder %s29, 1
      %p47 = por %p45, %p46
      %p48 = scmp.ne.s32.totalorder %s37, %s38
      %p49 = scmp.eq.s32.totalorder %s29, 0
      %p50 = por %p48, %p49
      %p51 = scmp.ne.s32.totalorder %s37, %s38
      %p52 = scmp.eq.s32.totalorder %s30, 1
      %p53 = por %p51, %p52
      %p55 = scmp.ne.s32.totalorder %s38, %s54
      %p56 = scmp.eq.s32.totalorder %s30, 0
      %p57 = por %p55, %p56
      %s58 = ssub.s32 %s24, %s31
      %p59 = scmp.eq.s32.totalorder %s58, 0
      %s61 = sadd.s32 %s60, 1
      %s62 = scalar_select %p59, %s60, %s61
      %p65 = pneg %p59
      %p66 = scmp.eq.s32.totalorder %s24, 1
      %p67 = por %p65, %p66
      %p68 = scmp.ne.s32.totalorder %s60, %s63
      %p69 = scmp.eq.s32.totalorder %s24, 0
      %p70 = por %p68, %p69
      %p71 = scmp.ne.s32.totalorder %s60, %s63
      %p72 = scmp.eq.s32.totalorder %s29, 1
      %p73 = por %p71, %p72
      %p74 = scmp.ne.s32.totalorder %s63, %s64
      %p75 = scmp.eq.s32.totalorder %s29, 0
      %p76 = por %p74, %p75
      %p77 = scmp.ne.s32.totalorder %s63, %s64
      %p78 = scmp.eq.s32.totalorder %s30, 1
      %p79 = por %p77, %p78
      %p81 = scmp.ne.s32.totalorder %s64, %s80
      %p82 = scmp.eq.s32.totalorder %s30, 0
      %p83 = por %p81, %p82
      %s85 = sadd.s32 %s84, 1
      %p88 = scmp.eq.s32.totalorder %s24, 1
      %p89 = scmp.ne.s32.totalorder %s84, %s86
      %p90 = scmp.eq.s32.totalorder %s24, 0
      %p91 = por %p89, %p90
      %p92 = scmp.ne.s32.totalorder %s84, %s86
      %p93 = scmp.eq.s32.totalorder %s29, 1
      %p94 = por %p92, %p93
      %p95 = scmp.ne.s32.totalorder %s86, %s87
      %p96 = scmp.eq.s32.totalorder %s29, 0
      %p97 = por %p95, %p96
      %p98 = scmp.ne.s32.totalorder %s86, %s87
      %p99 = scmp.eq.s32.totalorder %s30, 1
      %p100 = por %p98, %p99
      %p102 = scmp.ne.s32.totalorder %s87, %s101
      %p103 = scmp.eq.s32.totalorder %s30, 0
      %p104 = por %p102, %p103
      %s106 = sadd.s32 %s105, 1
      %p109 = scmp.eq.s32.totalorder %s24, 1
      %p110 = scmp.ne.s32.totalorder %s105, %s107
      %p111 = scmp.eq.s32.totalorder %s24, 0
      %p112 = por %p110, %p111
      %p113 = scmp.ne.s32.totalorder %s105, %s107
      %p114 = scmp.eq.s32.totalorder %s29, 1
      %p115 = por %p113, %p114
      %p116 = scmp.ne.s32.totalorder %s107, %s108
      %p117 = scmp.eq.s32.totalorder %s29, 0
      %p118 = por %p116, %p117
      %p119 = scmp.ne.s32.totalorder %s107, %s108
      %p120 = scmp.eq.s32.totalorder %s30, 1
      %p121 = por %p119, %p120
      %p123 = scmp.ne.s32.totalorder %s108, %s122
      %p124 = scmp.eq.s32.totalorder %s30, 0
      %p125 = por %p123, %p124
      %s126 = ssub.s32 %s24, %s31
      %p127 = scmp.eq.s32.totalorder %s126, 0
      %s129 = sadd.s32 %s128, 1
      %s130 = scalar_select %p127, %s128, %s129
      %p133 = pneg %p127
      %p134 = scmp.eq.s32.totalorder %s24, 1
      %p135 = por %p133, %p134
      %p136 = scmp.ne.s32.totalorder %s128, %s131
      %p137 = scmp.eq.s32.totalorder %s24, 0
      %p138 = por %p136, %p137
      %p139 = scmp.ne.s32.totalorder %s128, %s131
      %p140 = scmp.eq.s32.totalorder %s29, 1
      %p141 = por %p139, %p140
      %p142 = scmp.ne.s32.totalorder %s131, %s132
      %p143 = scmp.eq.s32.totalorder %s29, 0
      %p144 = por %p142, %p143
      %p145 = scmp.ne.s32.totalorder %s131, %s132
      %p146 = scmp.eq.s32.totalorder %s30, 1
      %p147 = por %p145, %p146
      %p149 = scmp.ne.s32.totalorder %s132, %s148
      %p150 = scmp.eq.s32.totalorder %s30, 0
      %p151 = por %p149, %p150
      %s152 = ssub.s32 %s24, %s31
      %p153 = scmp.eq.s32.totalorder %s152, 0
      %s155 = sadd.s32 %s154, 1
      %s156 = scalar_select %p153, %s154, %s155
      %p159 = pneg %p153
      %p160 = scmp.eq.s32.totalorder %s24, 1
      %p161 = por %p159, %p160
      %p162 = scmp.ne.s32.totalorder %s154, %s157
      %p163 = scmp.eq.s32.totalorder %s24, 0
      %p164 = por %p162, %p163
      %p165 = scmp.ne.s32.totalorder %s154, %s157
      %p166 = scmp.eq.s32.totalorder %s29, 1
      %p167 = por %p165, %p166
      %p168 = scmp.ne.s32.totalorder %s157, %s158
      %p169 = scmp.eq.s32.totalorder %s29, 0
      %p170 = por %p168, %p169
      %p171 = scmp.ne.s32.totalorder %s157, %s158
      %p172 = scmp.eq.s32.totalorder %s30, 1
      %p173 = por %p171, %p172
      %p175 = scmp.ne.s32.totalorder %s158, %s174
      %p176 = scmp.eq.s32.totalorder %s30, 0
      %p177 = por %p175, %p176
      %p178 = scmp.le.s32.totalorder 1, %s24
      %p179 = scmp.lt.s32.totalorder %s24, 3
      %p180 = pnand %p178, %p179
      %p181 = pneg %p180
      // Predicated region
      $region9: #{tpu_custom_call.1} parent=5 // pred_check
        _
      $region10: #{tpu_custom_call.1} parent=5 // pred_check_branch
        %183 = sbr.rel (%p180) target = $region12
      $region11: #{tpu_custom_call.1} parent=5 // pred_region
        %s184 = ssub.s32 %s24, 1
        // Predicated region
        $region13: #{tpu_custom_call.1} parent=11 // pred_check
          %p185 = pneg %p97
        $region14: #{tpu_custom_call.1} parent=11 // pred_check_branch
          %187 = sbr.rel (%p185) target = $region16
        $region15: #{tpu_custom_call.1} parent=11 // pred_region
          _
        $region16: #{tpu_custom_call.1} parent=11 // pred_fallthru
          _
        // Predicated region
        $region17: #{tpu_custom_call.1} parent=11 // pred_check
          %p188 = pneg %p118
        $region18: #{tpu_custom_call.1} parent=11 // pred_check_branch
          %190 = sbr.rel (%p188) target = $region20
        $region19: #{tpu_custom_call.1} parent=11 // pred_region
          _
        $region20: #{tpu_custom_call.1} parent=11 // pred_fallthru
          _
      $region12: #{tpu_custom_call.1} parent=5 // pred_fallthru
        _
      %p191 = scmp.lt.s32.totalorder %s24, 2
      // Predicated region
      $region21: #{tpu_custom_call.1} parent=5 // pred_check
        %p192 = pneg %p191
      $region22: #{tpu_custom_call.1} parent=5 // pred_check_branch
        %194 = sbr.rel (%p192) target = $region24
      $region23: #{tpu_custom_call.1} parent=5 // pred_region
        // Predicated region
        $region25: #{tpu_custom_call.1} parent=23 // pred_check
          %p195 = pneg %p44
        $region26: #{tpu_custom_call.1} parent=23 // pred_check_branch
          %197 = sbr.rel (%p195) target = $region28
        $region27: #{tpu_custom_call.1} parent=23 // pred_region
          %s198 = sand.u32 %s34, 1
          %s199 = scalar_lea.sflag [#allocation3], %s198
          %s200 = sand.u32 %s34, 1
          %s201 = smul.addr %s200, 64
          %s202 = scalar_lea.vmem [#allocation2], %s201
          %s203 = smul.u32 4, %s24
          %s205 = ssub.s32 1024, 1024
          %206 = vsyncadd %s199, %s205
          %s207 = smul.addr %s203, 2
          %s208 = smul.addr %s207, 128
          %s209 = scalar_lea.hbm %s0, %s208
          %s210 = sshll.u32 %s202, 4
          %s211 = int_to_ptr.vmem [resolvable:$true] %s210
          %216 = dma.hbm_to_vmem [thread:$0]  %s209, 1024, %s211, %s199, 128, 128, 8
        $region28: #{tpu_custom_call.1} parent=23 // pred_fallthru
          _
        // Predicated region
        $region29: #{tpu_custom_call.1} parent=23 // pred_check
          %p217 = pneg %p70
        $region30: #{tpu_custom_call.1} parent=23 // pred_check_branch
          %219 = sbr.rel (%p217) target = $region32
        $region31: #{tpu_custom_call.1} parent=23 // pred_region
          %s220 = sand.u32 %s60, 1
          %s221 = scalar_lea.sflag [#allocation6], %s220
          %s222 = sand.u32 %s60, 1
          %s223 = smul.addr %s222, 64
          %s224 = scalar_lea.vmem [#allocation5], %s223
          %s225 = smul.u32 4, %s24
          %s227 = ssub.s32 1024, 1024
          %228 = vsyncadd %s221, %s227
          %s229 = smul.addr %s225, 2
          %s230 = smul.addr %s229, 128
          %s231 = scalar_lea.hbm %s1, %s230
          %s232 = sshll.u32 %s224, 4
          %s233 = int_to_ptr.vmem [resolvable:$true] %s232
          %238 = dma.hbm_to_vmem [thread:$0]  %s231, 1024, %s233, %s221, 128, 128, 8
        $region32: #{tpu_custom_call.1} parent=23 // pred_fallthru
          _
      $region24: #{tpu_custom_call.1} parent=5 // pred_fallthru
        _
      %p239 = scmp.le.s32.totalorder 1, %s24
      %p240 = scmp.lt.s32.totalorder %s24, 3
      %p241 = pnand %p239, %p240
      %p242 = pneg %p241
      // Predicated region
      $region33: #{tpu_custom_call.1} parent=5 // pred_check
        _
      $region34: #{tpu_custom_call.1} parent=5 // pred_check_branch
        %244 = sbr.rel (%p241) target = $region36
      $region35: #{tpu_custom_call.1} parent=5 // pred_region
        %s245 = ssub.s32 %s24, 1
        %s246 = sand.u32 %s37, 1
        %s247 = scalar_lea.sflag [#allocation3], %s246
        %s248 = sand.u32 %s37, 1
        %s249 = smul.addr %s248, 64
        %s250 = scalar_lea.vmem [#allocation2], %s249
        // Predicated region
        $region37: #{tpu_custom_call.1} parent=35 // pred_check
          %p251 = pneg %p50
        $region38: #{tpu_custom_call.1} parent=35 // pred_check_branch
          %253 = sbr.rel (%p251) target = $region40
        $region39: #{tpu_custom_call.1} parent=35 // pred_region
          %254 = dma.done %s247, 1024
        $region40: #{tpu_custom_call.1} parent=35 // pred_fallthru
          _
        %s255 = sand.u32 %s63, 1
        %s256 = scalar_lea.sflag [#allocation6], %s255
        %s257 = sand.u32 %s63, 1
        %s258 = smul.addr %s257, 64
        %s259 = scalar_lea.vmem [#allocation5], %s258
        // Predicated region
        $region41: #{tpu_custom_call.1} parent=35 // pred_check
          %p260 = pneg %p76
        $region42: #{tpu_custom_call.1} parent=35 // pred_check_branch
          %262 = sbr.rel (%p260) target = $region44
        $region43: #{tpu_custom_call.1} parent=35 // pred_region
          %263 = dma.done %s256, 1024
        $region44: #{tpu_custom_call.1} parent=35 // pred_fallthru
          _
        %s264 = sand.u32 %s37, 1
        %s265 = scalar_lea.sflag [#allocation3], %s264
        %s266 = sand.u32 %s37, 1
        %s267 = smul.addr %s266, 64
        %s268 = scalar_lea.vmem [#allocation2], %s267
        %p269 = pneg %p50
        %p270 = pneg %p47
        %s271 = sand.u32 %s63, 1
        %s272 = scalar_lea.sflag [#allocation6], %s271
        %s273 = sand.u32 %s63, 1
        %s274 = smul.addr %s273, 64
        %s275 = scalar_lea.vmem [#allocation5], %s274
        %p276 = pneg %p76
        %p277 = pneg %p73
        %p278 = pneg %p97
        %p279 = pneg %p94
        %p280 = pneg %p118
        %p281 = pneg %p115
        %p282 = pneg %p144
        %p283 = pneg %p141
        %s284 = sand.u32 %s131, 1
        %s285 = scalar_lea.sflag [#allocation4], %s284
        %s286 = sand.u32 %s131, 1
        %s287 = scalar_lea.vmem [#allocation7], %s286
        %p288 = pneg %p170
        %p289 = pneg %p167
        %s290 = sand.u32 %s157, 1
        %s291 = scalar_lea.sflag [#allocation9], %s290
        %s292 = sand.u32 %s157, 1
        %s293 = scalar_lea.vmem [#allocation8], %s292
        %s294 = smul.u32 4, %s29
        %s295 = smul.u32 4, %s29
        %v296 = vld [vmem:[%s2] sm:$0xff]
        %v297 = vld [vmem:[%s2 + $0x8] sm:$0xff]
        %v298 = vld [vmem:[%s2 + $0x10] sm:$0xff]
        %v299 = vld [vmem:[%s2 + $0x18] sm:$0xff]
        %v300 = vld [vmem:[%s3] sm:$0xff]
        %v301 = vld [vmem:[%s3 + $0x8] sm:$0xff]
        %v302 = vld [vmem:[%s3 + $0x10] sm:$0xff]
        %v303 = vld [vmem:[%s3 + $0x18] sm:$0xff]
        %v304 = vld [vmem:[%s250] sm:$0xff]
        %v305 = vld [vmem:[%s250 + $0x8] sm:$0xff]
        %v306 = vld [vmem:[%s250 + $0x10] sm:$0xff]
        %v307 = vld [vmem:[%s250 + $0x18] sm:$0xff]
        %v308 = vld [vmem:[%s250 + $0x20] sm:$0xff]
        %v309 = vld [vmem:[%s250 + $0x28] sm:$0xff]
        %v310 = vld [vmem:[%s250 + $0x30] sm:$0xff]
        %v311 = vld [vmem:[%s250 + $0x38] sm:$0xff]
        %vm312 = vcmask 130048
        %v314 = vsel %vm312, %v304, 0
        %v317 = vsel %vm312, %v305, 0
        %v320 = vsel %vm312, %v306, 0
        %v323 = vsel %vm312, %v307, 0
        %v326 = vsel %vm312, %v308, 0
        %v329 = vsel %vm312, %v309, 0
        %v332 = vsel %vm312, %v310, 0
        %v335 = vsel %vm312, %v311, 0
        %337 = vmatprep.subr.mxu0 0.0
        %338 = vmatpush1.msra.mxu0 0.0
        %339 = vmatprep.subr.mxu0 0.0
        %340 = vmatpush1.msra.mxu0 0.0
        %341 = vmatprep.subr.mxu0 0.0
        %342 = vmatpush1.msra.mxu0 0.0
        %343 = vmatprep.subr.mxu0 0.0
        %344 = vmatpush1.msra.mxu0 0.0
        %345 = vmatprep.subr.mxu0 0.0
        %346 = vmatpush1.msra.mxu0 0.0
        %347 = vmatprep.subr.mxu0 0.0
        %348 = vmatpush1.msra.mxu0 0.0
        %349 = vmatprep.subr.mxu0 0.0
        %350 = vmatpush1.msra.mxu0 0.0
        %351 = vmatprep.subr.mxu0 0.0
        %352 = vmatpush1.msra.mxu0 0.0
        %353 = vmatprep.subr.mxu0 0.0
        %354 = vmatpush1.msra.mxu0 0.0
        %355 = vmatprep.subr.mxu0 0.0
        %356 = vmatpush1.msra.mxu0 0.0
        %357 = vmatprep.subr.mxu0 0.0
        %358 = vmatpush1.msra.mxu0 0.0
        %359 = vmatprep.subr.mxu0 0.0
        %360 = vmatpush1.msra.mxu0 0.0
        %361 = vmatprep.subr.mxu0 0.0
        %362 = vmatpush1.msra.mxu0 0.0
        %363 = vmatprep.subr.mxu0 0.0
        %364 = vmatpush1.msra.mxu0 0.0
        %365 = vmatprep.subr.mxu0 %v303
        %366 = vmatpush1.msra.mxu0 %v302
        %367 = vmatprep.subr.mxu0 %v301
        %368 = vmatpush1.msra.mxu0 %v300
        %369 = vmatprep.subr.mxu0 0.0
        %370 = vmatpush2.msra.mxu0 0.0
        %371 = vmatprep.subr.mxu0 0.0
        %372 = vmatpush2.msra.mxu0 0.0
        %373 = vmatprep.subr.mxu0 0.0
        %374 = vmatpush2.msra.mxu0 0.0
        %375 = vmatprep.subr.mxu0 0.0
        %376 = vmatpush2.msra.mxu0 0.0
        %377 = vmatprep.subr.mxu0 0.0
        %378 = vmatpush2.msra.mxu0 0.0
        %379 = vmatprep.subr.mxu0 0.0
        %380 = vmatpush2.msra.mxu0 0.0
        %381 = vmatprep.subr.mxu0 0.0
        %382 = vmatpush2.msra.mxu0 0.0
        %383 = vmatprep.subr.mxu0 0.0
        %384 = vmatpush2.msra.mxu0 0.0
        %385 = vmatprep.subr.mxu0 0.0
        %386 = vmatpush2.msra.mxu0 0.0
        %387 = vmatprep.subr.mxu0 0.0
        %388 = vmatpush2.msra.mxu0 0.0
        %389 = vmatprep.subr.mxu0 0.0
        %390 = vmatpush2.msra.mxu0 0.0
        %391 = vmatprep.subr.mxu0 0.0
        %392 = vmatpush2.msra.mxu0 0.0
        %393 = vmatprep.subr.mxu0 0.0
        %394 = vmatpush2.msra.mxu0 0.0
        %395 = vmatprep.subr.mxu0 0.0
        %396 = vmatpush2.msra.mxu0 0.0
        %397 = vmatprep.subr.mxu0 0.0
        %398 = vmatpush2.msra.mxu0 0.0
        %399 = vmatprep.subr.mxu0 0.0
        %400 = vmatpush2.msra.mxu0 0.0
        %401 = vmatprep.mubr.f32.mxu0 0.0
        %402 = vmatmul.mubr.f32.gmra.mxu0 %v314
        %v403 = vpop.f32.mrf.mxu0
        %v404 = vadd.f32 0.0, %v403
        %v405 = vpop.f32.mrf.mxu0
        %v406 = vadd.f32 0.0, %v405
        %407 = vmatprep.mubr.f32.mxu0 0.0
        %408 = vmatmul.mubr.f32.gmra.mxu0 %v317
        %v409 = vpop.f32.mrf.mxu0
        %v410 = vadd.f32 0.0, %v409
        %v411 = vpop.f32.mrf.mxu0
        %v412 = vadd.f32 0.0, %v411
        %413 = vmatprep.mubr.f32.mxu0 0.0
        %414 = vmatmul.mubr.f32.gmra.mxu0 %v320
        %v415 = vpop.f32.mrf.mxu0
        %v416 = vadd.f32 0.0, %v415
        %v417 = vpop.f32.mrf.mxu0
        %v418 = vadd.f32 0.0, %v417
        %419 = vmatprep.mubr.f32.mxu0 0.0
        %420 = vmatmul.mubr.f32.gmra.mxu0 %v323
        %v421 = vpop.f32.mrf.mxu0
        %v422 = vadd.f32 0.0, %v421
        %v423 = vpop.f32.mrf.mxu0
        %v424 = vadd.f32 0.0, %v423
        %425 = vmatprep.mubr.f32.mxu0 0.0
        %426 = vmatmul.mubr.f32.gmra.mxu0 %v326
        %v427 = vpop.f32.mrf.mxu0
        %v428 = vadd.f32 0.0, %v427
        %v429 = vpop.f32.mrf.mxu0
        %v430 = vadd.f32 0.0, %v429
        %431 = vmatprep.mubr.f32.mxu0 0.0
        %432 = vmatmul.mubr.f32.gmra.mxu0 %v329
        %v433 = vpop.f32.mrf.mxu0
        %v434 = vadd.f32 0.0, %v433
        %v435 = vpop.f32.mrf.mxu0
        %v436 = vadd.f32 0.0, %v435
        %437 = vmatprep.mubr.f32.mxu0 0.0
        %438 = vmatmul.mubr.f32.gmra.mxu0 %v332
        %v439 = vpop.f32.mrf.mxu0
        %v440 = vadd.f32 0.0, %v439
        %v441 = vpop.f32.mrf.mxu0
        %v442 = vadd.f32 0.0, %v441
        %443 = vmatprep.mubr.f32.mxu0 0.0
        %444 = vmatmul.mubr.f32.gmra.mxu0 %v335
        %v445 = vpop.f32.mrf.mxu0
        %v446 = vadd.f32 0.0, %v445
        %v447 = vpop.f32.mrf.mxu0
        %v448 = vadd.f32 0.0, %v447
        %449 = vdwg.mxu0
        %v450 = vld [vmem:[%s259] sm:$0xff]
        %v451 = vld [vmem:[%s259 + $0x8] sm:$0xff]
        %v452 = vld [vmem:[%s259 + $0x10] sm:$0xff]
        %v453 = vld [vmem:[%s259 + $0x18] sm:$0xff]
        %v454 = vld [vmem:[%s259 + $0x20] sm:$0xff]
        %v455 = vld [vmem:[%s259 + $0x28] sm:$0xff]
        %v456 = vld [vmem:[%s259 + $0x30] sm:$0xff]
        %v457 = vld [vmem:[%s259 + $0x38] sm:$0xff]
        %v459 = vsel %vm312, %v450, 0
        %v462 = vsel %vm312, %v451, 0
        %v465 = vsel %vm312, %v452, 0
        %v468 = vsel %vm312, %v453, 0
        %v471 = vsel %vm312, %v454, 0
        %v474 = vsel %vm312, %v455, 0
        %v477 = vsel %vm312, %v456, 0
        %v480 = vsel %vm312, %v457, 0
        %482 = vmatprep.subr.mxu0 0.0
        %483 = vmatpush1.msra.mxu0 0.0
        %484 = vmatprep.subr.mxu0 0.0
        %485 = vmatpush1.msra.mxu0 0.0
        %486 = vmatprep.subr.mxu0 0.0
        %487 = vmatpush1.msra.mxu0 0.0
        %488 = vmatprep.subr.mxu0 0.0
        %489 = vmatpush1.msra.mxu0 0.0
        %490 = vmatprep.subr.mxu0 0.0
        %491 = vmatpush1.msra.mxu0 0.0
        %492 = vmatprep.subr.mxu0 0.0
        %493 = vmatpush1.msra.mxu0 0.0
        %494 = vmatprep.subr.mxu0 0.0
        %495 = vmatpush1.msra.mxu0 0.0
        %496 = vmatprep.subr.mxu0 0.0
        %497 = vmatpush1.msra.mxu0 0.0
        %498 = vmatprep.subr.mxu0 0.0
        %499 = vmatpush1.msra.mxu0 0.0
        %500 = vmatprep.subr.mxu0 0.0
        %501 = vmatpush1.msra.mxu0 0.0
        %502 = vmatprep.subr.mxu0 0.0
        %503 = vmatpush1.msra.mxu0 0.0
        %504 = vmatprep.subr.mxu0 0.0
        %505 = vmatpush1.msra.mxu0 0.0
        %506 = vmatprep.subr.mxu0 0.0
        %507 = vmatpush1.msra.mxu0 0.0
        %508 = vmatprep.subr.mxu0 0.0
        %509 = vmatpush1.msra.mxu0 0.0
        %510 = vmatprep.subr.mxu0 %v303
        %511 = vmatpush1.msra.mxu0 %v302
        %512 = vmatprep.subr.mxu0 %v301
        %513 = vmatpush1.msra.mxu0 %v300
        %514 = vmatprep.subr.mxu0 0.0
        %515 = vmatpush2.msra.mxu0 0.0
        %516 = vmatprep.subr.mxu0 0.0
        %517 = vmatpush2.msra.mxu0 0.0
        %518 = vmatprep.subr.mxu0 0.0
        %519 = vmatpush2.msra.mxu0 0.0
        %520 = vmatprep.subr.mxu0 0.0
        %521 = vmatpush2.msra.mxu0 0.0
        %522 = vmatprep.subr.mxu0 0.0
        %523 = vmatpush2.msra.mxu0 0.0
        %524 = vmatprep.subr.mxu0 0.0
        %525 = vmatpush2.msra.mxu0 0.0
        %526 = vmatprep.subr.mxu0 0.0
        %527 = vmatpush2.msra.mxu0 0.0
        %528 = vmatprep.subr.mxu0 0.0
        %529 = vmatpush2.msra.mxu0 0.0
        %530 = vmatprep.subr.mxu0 0.0
        %531 = vmatpush2.msra.mxu0 0.0
        %532 = vmatprep.subr.mxu0 0.0
        %533 = vmatpush2.msra.mxu0 0.0
        %534 = vmatprep.subr.mxu0 0.0
        %535 = vmatpush2.msra.mxu0 0.0
        %536 = vmatprep.subr.mxu0 0.0
        %537 = vmatpush2.msra.mxu0 0.0
        %538 = vmatprep.subr.mxu0 0.0
        %539 = vmatpush2.msra.mxu0 0.0
        %540 = vmatprep.subr.mxu0 0.0
        %541 = vmatpush2.msra.mxu0 0.0
        %542 = vmatprep.subr.mxu0 0.0
        %543 = vmatpush2.msra.mxu0 0.0
        %544 = vmatprep.subr.mxu0 0.0
        %545 = vmatpush2.msra.mxu0 0.0
        %546 = vmatprep.mubr.f32.mxu0 0.0
        %547 = vmatmul.mubr.f32.gmra.mxu0 %v459
        %v548 = vpop.f32.mrf.mxu0
        %v549 = vadd.f32 0.0, %v548
        %v550 = vpop.f32.mrf.mxu0
        %v551 = vadd.f32 0.0, %v550
        %552 = vmatprep.mubr.f32.mxu0 0.0
        %553 = vmatmul.mubr.f32.gmra.mxu0 %v462
        %v554 = vpop.f32.mrf.mxu0
        %v555 = vadd.f32 0.0, %v554
        %v556 = vpop.f32.mrf.mxu0
        %v557 = vadd.f32 0.0, %v556
        %558 = vmatprep.mubr.f32.mxu0 0.0
        %559 = vmatmul.mubr.f32.gmra.mxu0 %v465
        %v560 = vpop.f32.mrf.mxu0
        %v561 = vadd.f32 0.0, %v560
        %v562 = vpop.f32.mrf.mxu0
        %v563 = vadd.f32 0.0, %v562
        %564 = vmatprep.mubr.f32.mxu0 0.0
        %565 = vmatmul.mubr.f32.gmra.mxu0 %v468
        %v566 = vpop.f32.mrf.mxu0
        %v567 = vadd.f32 0.0, %v566
        %v568 = vpop.f32.mrf.mxu0
        %v569 = vadd.f32 0.0, %v568
        %570 = vmatprep.mubr.f32.mxu0 0.0
        %571 = vmatmul.mubr.f32.gmra.mxu0 %v471
        %v572 = vpop.f32.mrf.mxu0
        %v573 = vadd.f32 0.0, %v572
        %v574 = vpop.f32.mrf.mxu0
        %v575 = vadd.f32 0.0, %v574
        %576 = vmatprep.mubr.f32.mxu0 0.0
        %577 = vmatmul.mubr.f32.gmra.mxu0 %v474
        %v578 = vpop.f32.mrf.mxu0
        %v579 = vadd.f32 0.0, %v578
        %v580 = vpop.f32.mrf.mxu0
        %v581 = vadd.f32 0.0, %v580
        %582 = vmatprep.mubr.f32.mxu0 0.0
        %583 = vmatmul.mubr.f32.gmra.mxu0 %v477
        %v584 = vpop.f32.mrf.mxu0
        %v585 = vadd.f32 0.0, %v584
        %v586 = vpop.f32.mrf.mxu0
        %v587 = vadd.f32 0.0, %v586
        %588 = vmatprep.mubr.f32.mxu0 0.0
        %589 = vmatmul.mubr.f32.gmra.mxu0 %v480
        %v590 = vpop.f32.mrf.mxu0
        %v591 = vadd.f32 0.0, %v590
        %v592 = vpop.f32.mrf.mxu0
        %v593 = vadd.f32 0.0, %v592
        %594 = vdwg.mxu0
        %v596 = vsel %vm312, %v296, 0
        %v599 = vsel %vm312, %v297, 0
        %v602 = vsel %vm312, %v298, 0
        %v605 = vsel %vm312, %v299, 0
        %607 = vmatprep.subr.mxu0 0.0
        %608 = vmatpush1.msra.mxu0 0.0
        %609 = vmatprep.subr.mxu0 0.0
        %610 = vmatpush1.msra.mxu0 0.0
        %611 = vmatprep.subr.mxu0 0.0
        %612 = vmatpush1.msra.mxu0 0.0
        %613 = vmatprep.subr.mxu0 0.0
        %614 = vmatpush1.msra.mxu0 0.0
        %615 = vmatprep.subr.mxu0 0.0
        %616 = vmatpush1.msra.mxu0 0.0
        %617 = vmatprep.subr.mxu0 0.0
        %618 = vmatpush1.msra.mxu0 0.0
        %619 = vmatprep.subr.mxu0 0.0
        %620 = vmatpush1.msra.mxu0 0.0
        %621 = vmatprep.subr.mxu0 0.0
        %622 = vmatpush1.msra.mxu0 0.0
        %623 = vmatprep.subr.mxu0 0.0
        %624 = vmatpush1.msra.mxu0 0.0
        %625 = vmatprep.subr.mxu0 0.0
        %626 = vmatpush1.msra.mxu0 0.0
        %627 = vmatprep.subr.mxu0 0.0
        %628 = vmatpush1.msra.mxu0 0.0
        %629 = vmatprep.subr.mxu0 0.0
        %630 = vmatpush1.msra.mxu0 0.0
        %631 = vmatprep.subr.mxu0 0.0
        %632 = vmatpush1.msra.mxu0 0.0
        %633 = vmatprep.subr.mxu0 0.0
        %634 = vmatpush1.msra.mxu0 0.0
        %635 = vmatprep.subr.mxu0 %v412
        %636 = vmatpush1.msra.mxu0 %v410
        %637 = vmatprep.subr.mxu0 %v406
        %638 = vmatpush1.msra.mxu0 %v404
        %639 = vmatprep.subr.mxu0 0.0
        %640 = vmatpush2.msra.mxu0 0.0
        %641 = vmatprep.subr.mxu0 0.0
        %642 = vmatpush2.msra.mxu0 0.0
        %643 = vmatprep.subr.mxu0 0.0
        %644 = vmatpush2.msra.mxu0 0.0
        %645 = vmatprep.subr.mxu0 0.0
        %646 = vmatpush2.msra.mxu0 0.0
        %647 = vmatprep.subr.mxu0 0.0
        %648 = vmatpush2.msra.mxu0 0.0
        %649 = vmatprep.subr.mxu0 0.0
        %650 = vmatpush2.msra.mxu0 0.0
        %651 = vmatprep.subr.mxu0 0.0
        %652 = vmatpush2.msra.mxu0 0.0
        %653 = vmatprep.subr.mxu0 0.0
        %654 = vmatpush2.msra.mxu0 0.0
        %655 = vmatprep.subr.mxu0 0.0
        %656 = vmatpush2.msra.mxu0 0.0
        %657 = vmatprep.subr.mxu0 0.0
        %658 = vmatpush2.msra.mxu0 0.0
        %659 = vmatprep.subr.mxu0 0.0
        %660 = vmatpush2.msra.mxu0 0.0
        %661 = vmatprep.subr.mxu0 0.0
        %662 = vmatpush2.msra.mxu0 0.0
        %663 = vmatprep.subr.mxu0 0.0
        %664 = vmatpush2.msra.mxu0 0.0
        %665 = vmatprep.subr.mxu0 0.0
        %666 = vmatpush2.msra.mxu0 0.0
        %667 = vmatprep.subr.mxu0 0.0
        %668 = vmatpush2.msra.mxu0 0.0
        %669 = vmatprep.subr.mxu0 0.0
        %670 = vmatpush2.msra.mxu0 0.0
        %671 = vmatprep.mubr.f32.mxu0 0.0
        %672 = vmatmul.mubr.f32.gmra.mxu0 %v596
        %v673 = vpop.f32.mrf.mxu0
        %v674 = vadd.f32 0.0, %v673
        %v675 = vpop.f32.mrf.mxu0
        %v676 = vadd.f32 0.0, %v675
        %677 = vmatprep.mubr.f32.mxu0 0.0
        %678 = vmatmul.mubr.f32.gmra.mxu0 %v599
        %v679 = vpop.f32.mrf.mxu0
        %v680 = vadd.f32 0.0, %v679
        %v681 = vpop.f32.mrf.mxu0
        %v682 = vadd.f32 0.0, %v681
        %683 = vmatprep.mubr.f32.mxu0 0.0
        %684 = vmatmul.mubr.f32.gmra.mxu0 %v602
        %v685 = vpop.f32.mrf.mxu0
        %v686 = vadd.f32 0.0, %v685
        %v687 = vpop.f32.mrf.mxu0
        %v688 = vadd.f32 0.0, %v687
        %689 = vmatprep.mubr.f32.mxu0 0.0
        %690 = vmatmul.mubr.f32.gmra.mxu0 %v605
        %v691 = vpop.f32.mrf.mxu0
        %v692 = vadd.f32 0.0, %v691
        %v693 = vpop.f32.mrf.mxu0
        %v694 = vadd.f32 0.0, %v693
        %695 = vdwg.mxu0
        %696 = vmatprep.subr.mxu0 0.0
        %697 = vmatpush1.msra.mxu0 0.0
        %698 = vmatprep.subr.mxu0 0.0
        %699 = vmatpush1.msra.mxu0 0.0
        %700 = vmatprep.subr.mxu0 0.0
        %701 = vmatpush1.msra.mxu0 0.0
        %702 = vmatprep.subr.mxu0 0.0
        %703 = vmatpush1.msra.mxu0 0.0
        %704 = vmatprep.subr.mxu0 0.0
        %705 = vmatpush1.msra.mxu0 0.0
        %706 = vmatprep.subr.mxu0 0.0
        %707 = vmatpush1.msra.mxu0 0.0
        %708 = vmatprep.subr.mxu0 0.0
        %709 = vmatpush1.msra.mxu0 0.0
        %710 = vmatprep.subr.mxu0 0.0
        %711 = vmatpush1.msra.mxu0 0.0
        %712 = vmatprep.subr.mxu0 0.0
        %713 = vmatpush1.msra.mxu0 0.0
        %714 = vmatprep.subr.mxu0 0.0
        %715 = vmatpush1.msra.mxu0 0.0
        %716 = vmatprep.subr.mxu0 0.0
        %717 = vmatpush1.msra.mxu0 0.0
        %718 = vmatprep.subr.mxu0 0.0
        %719 = vmatpush1.msra.mxu0 0.0
        %720 = vmatprep.subr.mxu0 0.0
        %721 = vmatpush1.msra.mxu0 0.0
        %722 = vmatprep.subr.mxu0 0.0
        %723 = vmatpush1.msra.mxu0 0.0
        %724 = vmatprep.subr.mxu0 %v557
        %725 = vmatpush1.msra.mxu0 %v555
        %726 = vmatprep.subr.mxu0 %v551
        %727 = vmatpush1.msra.mxu0 %v549
        %728 = vmatprep.subr.mxu0 0.0
        %729 = vmatpush2.msra.mxu0 0.0
        %730 = vmatprep.subr.mxu0 0.0
        %731 = vmatpush2.msra.mxu0 0.0
        %732 = vmatprep.subr.mxu0 0.0
        %733 = vmatpush2.msra.mxu0 0.0
        %734 = vmatprep.subr.mxu0 0.0
        %735 = vmatpush2.msra.mxu0 0.0
        %736 = vmatprep.subr.mxu0 0.0
        %737 = vmatpush2.msra.mxu0 0.0
        %738 = vmatprep.subr.mxu0 0.0
        %739 = vmatpush2.msra.mxu0 0.0
        %740 = vmatprep.subr.mxu0 0.0
        %741 = vmatpush2.msra.mxu0 0.0
        %742 = vmatprep.subr.mxu0 0.0
        %743 = vmatpush2.msra.mxu0 0.0
        %744 = vmatprep.subr.mxu0 0.0
        %745 = vmatpush2.msra.mxu0 0.0
        %746 = vmatprep.subr.mxu0 0.0
        %747 = vmatpush2.msra.mxu0 0.0
        %748 = vmatprep.subr.mxu0 0.0
        %749 = vmatpush2.msra.mxu0 0.0
        %750 = vmatprep.subr.mxu0 0.0
        %751 = vmatpush2.msra.mxu0 0.0
        %752 = vmatprep.subr.mxu0 0.0
        %753 = vmatpush2.msra.mxu0 0.0
        %754 = vmatprep.subr.mxu0 0.0
        %755 = vmatpush2.msra.mxu0 0.0
        %756 = vmatprep.subr.mxu0 0.0
        %757 = vmatpush2.msra.mxu0 0.0
        %758 = vmatprep.subr.mxu0 0.0
        %759 = vmatpush2.msra.mxu0 0.0
        %760 = vmatprep.mubr.f32.mxu0 0.0
        %761 = vmatmul.mubr.f32.gmra.mxu0 %v596
        %v762 = vpop.f32.mrf.mxu0
        %v763 = vadd.f32 0.0, %v762
        %v764 = vpop.f32.mrf.mxu0
        %v765 = vadd.f32 0.0, %v764
        %766 = vmatprep.mubr.f32.mxu0 0.0
        %767 = vmatmul.mubr.f32.gmra.mxu0 %v599
        %v768 = vpop.f32.mrf.mxu0
        %v769 = vadd.f32 0.0, %v768
        %v770 = vpop.f32.mrf.mxu0
        %v771 = vadd.f32 0.0, %v770
        %772 = vmatprep.mubr.f32.mxu0 0.0
        %773 = vmatmul.mubr.f32.gmra.mxu0 %v602
        %v774 = vpop.f32.mrf.mxu0
        %v775 = vadd.f32 0.0, %v774
        %v776 = vpop.f32.mrf.mxu0
        %v777 = vadd.f32 0.0, %v776
        %778 = vmatprep.mubr.f32.mxu0 0.0
        %779 = vmatmul.mubr.f32.gmra.mxu0 %v605
        %v780 = vpop.f32.mrf.mxu0
        %v781 = vadd.f32 0.0, %v780
        %v782 = vpop.f32.mrf.mxu0
        %v783 = vadd.f32 0.0, %v782
        %784 = vdwg.mxu0
        %v785 = vsub.f32 %v674, %v688
        %v786 = vsub.f32 %v680, %v694
        %v787 = vadd.f32 %v676, %v686
        %v788 = vadd.f32 %v682, %v692
        %v789 = vsub.f32 %v763, %v777
        %v790 = vsub.f32 %v769, %v783
        %v791 = vadd.f32 %v765, %v775
        %v792 = vadd.f32 %v771, %v781
        %v793 = vmul.f32 %v785, %v785
        %v794 = vmul.f32 %v786, %v786
        %v795 = vmul.f32 %v787, %v787
        %v796 = vmul.f32 %v788, %v788
        %v797 = vadd.f32 %v793, %v795
        %v798 = vadd.f32 %v794, %v796
        %v799 = vmul.f32 %v789, %v789
        %v800 = vmul.f32 %v790, %v790
        %v801 = vmul.f32 %v791, %v791
        %v802 = vmul.f32 %v792, %v792
        %v803 = vadd.f32 %v799, %v801
        %v804 = vadd.f32 %v800, %v802
        %v805 = vrsqrt.pop %v797
        %v806 = vmul.f32 %v797, %v805
        %vm807 = vcmp.eq.f32.partialorder %v797, inf
        %v808 = vsel %vm807, %v797, %v806
        %vm809 = vcmp.eq.f32.partialorder %v797, 0.0
        %v810 = vand.u32 %v797, 2147483648
        %v811 = vsel %vm809, %v810, %v808
        %v812 = vrsqrt.pop %v798
        %v813 = vmul.f32 %v798, %v812
        %vm814 = vcmp.eq.f32.partialorder %v798, inf
        %v815 = vsel %vm814, %v798, %v813
        %vm816 = vcmp.eq.f32.partialorder %v798, 0.0
        %v817 = vand.u32 %v798, 2147483648
        %v818 = vsel %vm816, %v817, %v815
        %v819 = vrsqrt.pop %v803
        %v820 = vmul.f32 %v803, %v819
        %vm821 = vcmp.eq.f32.partialorder %v803, inf
        %v822 = vsel %vm821, %v803, %v820
        %vm823 = vcmp.eq.f32.partialorder %v803, 0.0
        %v824 = vand.u32 %v803, 2147483648
        %v825 = vsel %vm823, %v824, %v822
        %v826 = vrsqrt.pop %v804
        %v827 = vmul.f32 %v804, %v826
        %vm828 = vcmp.eq.f32.partialorder %v804, inf
        %v829 = vsel %vm828, %v804, %v827
        %vm830 = vcmp.eq.f32.partialorder %v804, 0.0
        %v831 = vand.u32 %v804, 2147483648
        %v832 = vsel %vm830, %v831, %v829
        %v833 = vsub.f32 %v811, %v825
        %v834 = vsub.f32 %v818, %v832
        %v835 = vand.u32 2147483647, %v833
        %v836 = vand.u32 2147483647, %v834
        %v837 = vmul.f32 %v785, %v789
        %v838 = vmul.f32 %v786, %v790
        %v839 = vmul.f32 %v787, %v791
        %v840 = vmul.f32 %v788, %v792
        %v841 = vadd.f32 %v837, %v839
        %v842 = vadd.f32 %v838, %v840
        %v843 = vadd.f32 %v797, 1e-12
        %v844 = vadd.f32 %v798, 1e-12
        %v845 = vrsqrt.pop %v843
        %v846 = vrsqrt.pop %v844
        %v847 = vmul.f32 %v841, %v845
        %v848 = vmul.f32 %v842, %v846
        %v849 = vadd.f32 %v803, 1e-12
        %v850 = vadd.f32 %v804, 1e-12
        %v851 = vrsqrt.pop %v849
        %v852 = vrsqrt.pop %v850
        %v853 = vmul.f32 %v847, %v851
        %v854 = vmul.f32 %v848, %v852
        %v855 = vadd.f32 %v835, %v836
        %v856 = vrot.slane %v855, 4
        %v857 = vadd.f32 %v855, %v856
        %v858 = vrot.slane %v857, 2
        %v859 = vadd.f32 %v857, %v858
        %v860 = vrot.slane %v859, 1
        %v861 = vadd.f32 %v859, %v860
        %v862 = vadd.f32 %v861, 0.0
        %v863 = vadd.f32 %v853, %v854
        %v864 = vrot.slane %v863, 4
        %v865 = vadd.f32 %v863, %v864
        %v866 = vrot.slane %v865, 2
        %v867 = vadd.f32 %v865, %v866
        %v868 = vrot.slane %v867, 1
        %v869 = vadd.f32 %v867, %v868
        %v870 = vadd.f32 %v869, 0.0
        %871 = vmatprep.subr.mxu0 0.0
        %872 = vmatpush1.msra.mxu0 0.0
        %873 = vmatprep.subr.mxu0 0.0
        %874 = vmatpush1.msra.mxu0 0.0
        %875 = vmatprep.subr.mxu0 0.0
        %876 = vmatpush1.msra.mxu0 0.0
        %877 = vmatprep.subr.mxu0 0.0
        %878 = vmatpush1.msra.mxu0 0.0
        %879 = vmatprep.subr.mxu0 0.0
        %880 = vmatpush1.msra.mxu0 0.0
        %881 = vmatprep.subr.mxu0 0.0
        %882 = vmatpush1.msra.mxu0 0.0
        %883 = vmatprep.subr.mxu0 0.0
        %884 = vmatpush1.msra.mxu0 0.0
        %885 = vmatprep.subr.mxu0 0.0
        %886 = vmatpush1.msra.mxu0 0.0
        %887 = vmatprep.subr.mxu0 0.0
        %888 = vmatpush1.msra.mxu0 0.0
        %889 = vmatprep.subr.mxu0 0.0
        %890 = vmatpush1.msra.mxu0 0.0
        %891 = vmatprep.subr.mxu0 0.0
        %892 = vmatpush1.msra.mxu0 0.0
        %893 = vmatprep.subr.mxu0 0.0
        %894 = vmatpush1.msra.mxu0 0.0
        %895 = vmatprep.subr.mxu0 0.0
        %896 = vmatpush1.msra.mxu0 0.0
        %897 = vmatprep.subr.mxu0 0.0
        %898 = vmatpush1.msra.mxu0 0.0
        %899 = vmatprep.subr.mxu0 %v424
        %900 = vmatpush1.msra.mxu0 %v422
        %901 = vmatprep.subr.mxu0 %v418
        %902 = vmatpush1.msra.mxu0 %v416
        %903 = vmatprep.subr.mxu0 0.0
        %904 = vmatpush2.msra.mxu0 0.0
        %905 = vmatprep.subr.mxu0 0.0
        %906 = vmatpush2.msra.mxu0 0.0
        %907 = vmatprep.subr.mxu0 0.0
        %908 = vmatpush2.msra.mxu0 0.0
        %909 = vmatprep.subr.mxu0 0.0
        %910 = vmatpush2.msra.mxu0 0.0
        %911 = vmatprep.subr.mxu0 0.0
        %912 = vmatpush2.msra.mxu0 0.0
        %913 = vmatprep.subr.mxu0 0.0
        %914 = vmatpush2.msra.mxu0 0.0
        %915 = vmatprep.subr.mxu0 0.0
        %916 = vmatpush2.msra.mxu0 0.0
        %917 = vmatprep.subr.mxu0 0.0
        %918 = vmatpush2.msra.mxu0 0.0
        %919 = vmatprep.subr.mxu0 0.0
        %920 = vmatpush2.msra.mxu0 0.0
        %921 = vmatprep.subr.mxu0 0.0
        %922 = vmatpush2.msra.mxu0 0.0
        %923 = vmatprep.subr.mxu0 0.0
        %924 = vmatpush2.msra.mxu0 0.0
        %925 = vmatprep.subr.mxu0 0.0
        %926 = vmatpush2.msra.mxu0 0.0
        %927 = vmatprep.subr.mxu0 0.0
        %928 = vmatpush2.msra.mxu0 0.0
        %929 = vmatprep.subr.mxu0 0.0
        %930 = vmatpush2.msra.mxu0 0.0
        %931 = vmatprep.subr.mxu0 0.0
        %932 = vmatpush2.msra.mxu0 0.0
        %933 = vmatprep.subr.mxu0 0.0
        %934 = vmatpush2.msra.mxu0 0.0
        %935 = vmatprep.mubr.f32.mxu0 0.0
        %936 = vmatmul.mubr.f32.gmra.mxu0 %v596
        %v937 = vpop.f32.mrf.mxu0
        %v938 = vadd.f32 0.0, %v937
        %v939 = vpop.f32.mrf.mxu0
        %v940 = vadd.f32 0.0, %v939
        %941 = vmatprep.mubr.f32.mxu0 0.0
        %942 = vmatmul.mubr.f32.gmra.mxu0 %v599
        %v943 = vpop.f32.mrf.mxu0
        %v944 = vadd.f32 0.0, %v943
        %v945 = vpop.f32.mrf.mxu0
        %v946 = vadd.f32 0.0, %v945
        %947 = vmatprep.mubr.f32.mxu0 0.0
        %948 = vmatmul.mubr.f32.gmra.mxu0 %v602
        %v949 = vpop.f32.mrf.mxu0
        %v950 = vadd.f32 0.0, %v949
        %v951 = vpop.f32.mrf.mxu0
        %v952 = vadd.f32 0.0, %v951
        %953 = vmatprep.mubr.f32.mxu0 0.0
        %954 = vmatmul.mubr.f32.gmra.mxu0 %v605
        %v955 = vpop.f32.mrf.mxu0
        %v956 = vadd.f32 0.0, %v955
        %v957 = vpop.f32.mrf.mxu0
        %v958 = vadd.f32 0.0, %v957
        %959 = vdwg.mxu0
        %960 = vmatprep.subr.mxu0 0.0
        %961 = vmatpush1.msra.mxu0 0.0
        %962 = vmatprep.subr.mxu0 0.0
        %963 = vmatpush1.msra.mxu0 0.0
        %964 = vmatprep.subr.mxu0 0.0
        %965 = vmatpush1.msra.mxu0 0.0
        %966 = vmatprep.subr.mxu0 0.0
        %967 = vmatpush1.msra.mxu0 0.0
        %968 = vmatprep.subr.mxu0 0.0
        %969 = vmatpush1.msra.mxu0 0.0
        %970 = vmatprep.subr.mxu0 0.0
        %971 = vmatpush1.msra.mxu0 0.0
        %972 = vmatprep.subr.mxu0 0.0
        %973 = vmatpush1.msra.mxu0 0.0
        %974 = vmatprep.subr.mxu0 0.0
        %975 = vmatpush1.msra.mxu0 0.0
        %976 = vmatprep.subr.mxu0 0.0
        %977 = vmatpush1.msra.mxu0 0.0
        %978 = vmatprep.subr.mxu0 0.0
        %979 = vmatpush1.msra.mxu0 0.0
        %980 = vmatprep.subr.mxu0 0.0
        %981 = vmatpush1.msra.mxu0 0.0
        %982 = vmatprep.subr.mxu0 0.0
        %983 = vmatpush1.msra.mxu0 0.0
        %984 = vmatprep.subr.mxu0 0.0
        %985 = vmatpush1.msra.mxu0 0.0
        %986 = vmatprep.subr.mxu0 0.0
        %987 = vmatpush1.msra.mxu0 0.0
        %988 = vmatprep.subr.mxu0 %v569
        %989 = vmatpush1.msra.mxu0 %v567
        %990 = vmatprep.subr.mxu0 %v563
        %991 = vmatpush1.msra.mxu0 %v561
        %992 = vmatprep.subr.mxu0 0.0
        %993 = vmatpush2.msra.mxu0 0.0
        %994 = vmatprep.subr.mxu0 0.0
        %995 = vmatpush2.msra.mxu0 0.0
        %996 = vmatprep.subr.mxu0 0.0
        %997 = vmatpush2.msra.mxu0 0.0
        %998 = vmatprep.subr.mxu0 0.0
        %999 = vmatpush2.msra.mxu0 0.0
        %1000 = vmatprep.subr.mxu0 0.0
        %1001 = vmatpush2.msra.mxu0 0.0
        %1002 = vmatprep.subr.mxu0 0.0
        %1003 = vmatpush2.msra.mxu0 0.0
        %1004 = vmatprep.subr.mxu0 0.0
        %1005 = vmatpush2.msra.mxu0 0.0
        %1006 = vmatprep.subr.mxu0 0.0
        %1007 = vmatpush2.msra.mxu0 0.0
        %1008 = vmatprep.subr.mxu0 0.0
        %1009 = vmatpush2.msra.mxu0 0.0
        %1010 = vmatprep.subr.mxu0 0.0
        %1011 = vmatpush2.msra.mxu0 0.0
        %1012 = vmatprep.subr.mxu0 0.0
        %1013 = vmatpush2.msra.mxu0 0.0
        %1014 = vmatprep.subr.mxu0 0.0
        %1015 = vmatpush2.msra.mxu0 0.0
        %1016 = vmatprep.subr.mxu0 0.0
        %1017 = vmatpush2.msra.mxu0 0.0
        %1018 = vmatprep.subr.mxu0 0.0
        %1019 = vmatpush2.msra.mxu0 0.0
        %1020 = vmatprep.subr.mxu0 0.0
        %1021 = vmatpush2.msra.mxu0 0.0
        %1022 = vmatprep.subr.mxu0 0.0
        %1023 = vmatpush2.msra.mxu0 0.0
        %1024 = vmatprep.mubr.f32.mxu0 0.0
        %1025 = vmatmul.mubr.f32.gmra.mxu0 %v596
        %v1026 = vpop.f32.mrf.mxu0
        %v1027 = vadd.f32 0.0, %v1026
        %v1028 = vpop.f32.mrf.mxu0
        %v1029 = vadd.f32 0.0, %v1028
        %1030 = vmatprep.mubr.f32.mxu0 0.0
        %1031 = vmatmul.mubr.f32.gmra.mxu0 %v599
        %v1032 = vpop.f32.mrf.mxu0
        %v1033 = vadd.f32 0.0, %v1032
        %v1034 = vpop.f32.mrf.mxu0
        %v1035 = vadd.f32 0.0, %v1034
        %1036 = vmatprep.mubr.f32.mxu0 0.0
        %1037 = vmatmul.mubr.f32.gmra.mxu0 %v602
        %v1038 = vpop.f32.mrf.mxu0
        %v1039 = vadd.f32 0.0, %v1038
        %v1040 = vpop.f32.mrf.mxu0
        %v1041 = vadd.f32 0.0, %v1040
        %1042 = vmatprep.mubr.f32.mxu0 0.0
        %1043 = vmatmul.mubr.f32.gmra.mxu0 %v605
        %v1044 = vpop.f32.mrf.mxu0
        %v1045 = vadd.f32 0.0, %v1044
        %v1046 = vpop.f32.mrf.mxu0
        %v1047 = vadd.f32 0.0, %v1046
        %1048 = vdwg.mxu0
        %v1049 = vsub.f32 %v938, %v952
        %v1050 = vsub.f32 %v944, %v958
        %v1051 = vadd.f32 %v940, %v950
        %v1052 = vadd.f32 %v946, %v956
        %v1053 = vsub.f32 %v1027, %v1041
        %v1054 = vsub.f32 %v1033, %v1047
        %v1055 = vadd.f32 %v1029, %v1039
        %v1056 = vadd.f32 %v1035, %v1045
        %v1057 = vmul.f32 %v1049, %v1049
        %v1058 = vmul.f32 %v1050, %v1050
        %v1059 = vmul.f32 %v1051, %v1051
        %v1060 = vmul.f32 %v1052, %v1052
        %v1061 = vadd.f32 %v1057, %v1059
        %v1062 = vadd.f32 %v1058, %v1060
        %v1063 = vmul.f32 %v1053, %v1053
        %v1064 = vmul.f32 %v1054, %v1054
        %v1065 = vmul.f32 %v1055, %v1055
        %v1066 = vmul.f32 %v1056, %v1056
        %v1067 = vadd.f32 %v1063, %v1065
        %v1068 = vadd.f32 %v1064, %v1066
        %v1069 = vrsqrt.pop %v1061
        %v1070 = vmul.f32 %v1061, %v1069
        %vm1071 = vcmp.eq.f32.partialorder %v1061, inf
        %v1072 = vsel %vm1071, %v1061, %v1070
        %vm1073 = vcmp.eq.f32.partialorder %v1061, 0.0
        %v1074 = vand.u32 %v1061, 2147483648
        %v1075 = vsel %vm1073, %v1074, %v1072
        %v1076 = vrsqrt.pop %v1062
        %v1077 = vmul.f32 %v1062, %v1076
        %vm1078 = vcmp.eq.f32.partialorder %v1062, inf
        %v1079 = vsel %vm1078, %v1062, %v1077
        %vm1080 = vcmp.eq.f32.partialorder %v1062, 0.0
        %v1081 = vand.u32 %v1062, 2147483648
        %v1082 = vsel %vm1080, %v1081, %v1079
        %v1083 = vrsqrt.pop %v1067
        %v1084 = vmul.f32 %v1067, %v1083
        %vm1085 = vcmp.eq.f32.partialorder %v1067, inf
        %v1086 = vsel %vm1085, %v1067, %v1084
        %vm1087 = vcmp.eq.f32.partialorder %v1067, 0.0
        %v1088 = vand.u32 %v1067, 2147483648
        %v1089 = vsel %vm1087, %v1088, %v1086
        %v1090 = vrsqrt.pop %v1068
        %v1091 = vmul.f32 %v1068, %v1090
        %vm1092 = vcmp.eq.f32.partialorder %v1068, inf
        %v1093 = vsel %vm1092, %v1068, %v1091
        %vm1094 = vcmp.eq.f32.partialorder %v1068, 0.0
        %v1095 = vand.u32 %v1068, 2147483648
        %v1096 = vsel %vm1094, %v1095, %v1093
        %v1097 = vsub.f32 %v1075, %v1089
        %v1098 = vsub.f32 %v1082, %v1096
        %v1099 = vand.u32 2147483647, %v1097
        %v1100 = vand.u32 2147483647, %v1098
        %v1101 = vmul.f32 %v1049, %v1053
        %v1102 = vmul.f32 %v1050, %v1054
        %v1103 = vmul.f32 %v1051, %v1055
        %v1104 = vmul.f32 %v1052, %v1056
        %v1105 = vadd.f32 %v1101, %v1103
        %v1106 = vadd.f32 %v1102, %v1104
        %v1107 = vadd.f32 %v1061, 1e-12
        %v1108 = vadd.f32 %v1062, 1e-12
        %v1109 = vrsqrt.pop %v1107
        %v1110 = vrsqrt.pop %v1108
        %v1111 = vmul.f32 %v1105, %v1109
        %v1112 = vmul.f32 %v1106, %v1110
        %v1113 = vadd.f32 %v1067, 1e-12
        %v1114 = vadd.f32 %v1068, 1e-12
        %v1115 = vrsqrt.pop %v1113
        %v1116 = vrsqrt.pop %v1114
        %v1117 = vmul.f32 %v1111, %v1115
        %v1118 = vmul.f32 %v1112, %v1116
        %v1119 = vadd.f32 %v1099, %v1100
        %v1120 = vrot.slane %v1119, 4
        %v1121 = vadd.f32 %v1119, %v1120
        %v1122 = vrot.slane %v1121, 2
        %v1123 = vadd.f32 %v1121, %v1122
        %v1124 = vrot.slane %v1123, 1
        %v1125 = vadd.f32 %v1123, %v1124
        %v1126 = vadd.f32 %v862, %v1125
        %v1127 = vadd.f32 %v1117, %v1118
        %v1128 = vrot.slane %v1127, 4
        %v1129 = vadd.f32 %v1127, %v1128
        %v1130 = vrot.slane %v1129, 2
        %v1131 = vadd.f32 %v1129, %v1130
        %v1132 = vrot.slane %v1131, 1
        %v1133 = vadd.f32 %v1131, %v1132
        %v1134 = vadd.f32 %v870, %v1133
        %1135 = vmatprep.subr.mxu0 0.0
        %1136 = vmatpush1.msra.mxu0 0.0
        %1137 = vmatprep.subr.mxu0 0.0
        %1138 = vmatpush1.msra.mxu0 0.0
        %1139 = vmatprep.subr.mxu0 0.0
        %1140 = vmatpush1.msra.mxu0 0.0
        %1141 = vmatprep.subr.mxu0 0.0
        %1142 = vmatpush1.msra.mxu0 0.0
        %1143 = vmatprep.subr.mxu0 0.0
        %1144 = vmatpush1.msra.mxu0 0.0
        %1145 = vmatprep.subr.mxu0 0.0
        %1146 = vmatpush1.msra.mxu0 0.0
        %1147 = vmatprep.subr.mxu0 0.0
        %1148 = vmatpush1.msra.mxu0 0.0
        %1149 = vmatprep.subr.mxu0 0.0
        %1150 = vmatpush1.msra.mxu0 0.0
        %1151 = vmatprep.subr.mxu0 0.0
        %1152 = vmatpush1.msra.mxu0 0.0
        %1153 = vmatprep.subr.mxu0 0.0
        %1154 = vmatpush1.msra.mxu0 0.0
        %1155 = vmatprep.subr.mxu0 0.0
        %1156 = vmatpush1.msra.mxu0 0.0
        %1157 = vmatprep.subr.mxu0 0.0
        %1158 = vmatpush1.msra.mxu0 0.0
        %1159 = vmatprep.subr.mxu0 0.0
        %1160 = vmatpush1.msra.mxu0 0.0
        %1161 = vmatprep.subr.mxu0 0.0
        %1162 = vmatpush1.msra.mxu0 0.0
        %1163 = vmatprep.subr.mxu0 %v436
        %1164 = vmatpush1.msra.mxu0 %v434
        %1165 = vmatprep.subr.mxu0 %v430
        %1166 = vmatpush1.msra.mxu0 %v428
        %1167 = vmatprep.subr.mxu0 0.0
        %1168 = vmatpush2.msra.mxu0 0.0
        %1169 = vmatprep.subr.mxu0 0.0
        %1170 = vmatpush2.msra.mxu0 0.0
        %1171 = vmatprep.subr.mxu0 0.0
        %1172 = vmatpush2.msra.mxu0 0.0
        %1173 = vmatprep.subr.mxu0 0.0
        %1174 = vmatpush2.msra.mxu0 0.0
        %1175 = vmatprep.subr.mxu0 0.0
        %1176 = vmatpush2.msra.mxu0 0.0
        %1177 = vmatprep.subr.mxu0 0.0
        %1178 = vmatpush2.msra.mxu0 0.0
        %1179 = vmatprep.subr.mxu0 0.0
        %1180 = vmatpush2.msra.mxu0 0.0
        %1181 = vmatprep.subr.mxu0 0.0
        %1182 = vmatpush2.msra.mxu0 0.0
        %1183 = vmatprep.subr.mxu0 0.0
        %1184 = vmatpush2.msra.mxu0 0.0
        %1185 = vmatprep.subr.mxu0 0.0
        %1186 = vmatpush2.msra.mxu0 0.0
        %1187 = vmatprep.subr.mxu0 0.0
        %1188 = vmatpush2.msra.mxu0 0.0
        %1189 = vmatprep.subr.mxu0 0.0
        %1190 = vmatpush2.msra.mxu0 0.0
        %1191 = vmatprep.subr.mxu0 0.0
        %1192 = vmatpush2.msra.mxu0 0.0
        %1193 = vmatprep.subr.mxu0 0.0
        %1194 = vmatpush2.msra.mxu0 0.0
        %1195 = vmatprep.subr.mxu0 0.0
        %1196 = vmatpush2.msra.mxu0 0.0
        %1197 = vmatprep.subr.mxu0 0.0
        %1198 = vmatpush2.msra.mxu0 0.0
        %1199 = vmatprep.mubr.f32.mxu0 0.0
        %1200 = vmatmul.mubr.f32.gmra.mxu0 %v596
        %v1201 = vpop.f32.mrf.mxu0
        %v1202 = vadd.f32 0.0, %v1201
        %v1203 = vpop.f32.mrf.mxu0
        %v1204 = vadd.f32 0.0, %v1203
        %1205 = vmatprep.mubr.f32.mxu0 0.0
        %1206 = vmatmul.mubr.f32.gmra.mxu0 %v599
        %v1207 = vpop.f32.mrf.mxu0
        %v1208 = vadd.f32 0.0, %v1207
        %v1209 = vpop.f32.mrf.mxu0
        %v1210 = vadd.f32 0.0, %v1209
        %1211 = vmatprep.mubr.f32.mxu0 0.0
        %1212 = vmatmul.mubr.f32.gmra.mxu0 %v602
        %v1213 = vpop.f32.mrf.mxu0
        %v1214 = vadd.f32 0.0, %v1213
        %v1215 = vpop.f32.mrf.mxu0
        %v1216 = vadd.f32 0.0, %v1215
        %1217 = vmatprep.mubr.f32.mxu0 0.0
        %1218 = vmatmul.mubr.f32.gmra.mxu0 %v605
        %v1219 = vpop.f32.mrf.mxu0
        %v1220 = vadd.f32 0.0, %v1219
        %v1221 = vpop.f32.mrf.mxu0
        %v1222 = vadd.f32 0.0, %v1221
        %1223 = vdwg.mxu0
        %1224 = vmatprep.subr.mxu0 0.0
        %1225 = vmatpush1.msra.mxu0 0.0
        %1226 = vmatprep.subr.mxu0 0.0
        %1227 = vmatpush1.msra.mxu0 0.0
        %1228 = vmatprep.subr.mxu0 0.0
        %1229 = vmatpush1.msra.mxu0 0.0
        %1230 = vmatprep.subr.mxu0 0.0
        %1231 = vmatpush1.msra.mxu0 0.0
        %1232 = vmatprep.subr.mxu0 0.0
        %1233 = vmatpush1.msra.mxu0 0.0
        %1234 = vmatprep.subr.mxu0 0.0
        %1235 = vmatpush1.msra.mxu0 0.0
        %1236 = vmatprep.subr.mxu0 0.0
        %1237 = vmatpush1.msra.mxu0 0.0
        %1238 = vmatprep.subr.mxu0 0.0
        %1239 = vmatpush1.msra.mxu0 0.0
        %1240 = vmatprep.subr.mxu0 0.0
        %1241 = vmatpush1.msra.mxu0 0.0
        %1242 = vmatprep.subr.mxu0 0.0
        %1243 = vmatpush1.msra.mxu0 0.0
        %1244 = vmatprep.subr.mxu0 0.0
        %1245 = vmatpush1.msra.mxu0 0.0
        %1246 = vmatprep.subr.mxu0 0.0
        %1247 = vmatpush1.msra.mxu0 0.0
        %1248 = vmatprep.subr.mxu0 0.0
        %1249 = vmatpush1.msra.mxu0 0.0
        %1250 = vmatprep.subr.mxu0 0.0
        %1251 = vmatpush1.msra.mxu0 0.0
        %1252 = vmatprep.subr.mxu0 %v581
        %1253 = vmatpush1.msra.mxu0 %v579
        %1254 = vmatprep.subr.mxu0 %v575
        %1255 = vmatpush1.msra.mxu0 %v573
        %1256 = vmatprep.subr.mxu0 0.0
        %1257 = vmatpush2.msra.mxu0 0.0
        %1258 = vmatprep.subr.mxu0 0.0
        %1259 = vmatpush2.msra.mxu0 0.0
        %1260 = vmatprep.subr.mxu0 0.0
        %1261 = vmatpush2.msra.mxu0 0.0
        %1262 = vmatprep.subr.mxu0 0.0
        %1263 = vmatpush2.msra.mxu0 0.0
        %1264 = vmatprep.subr.mxu0 0.0
        %1265 = vmatpush2.msra.mxu0 0.0
        %1266 = vmatprep.subr.mxu0 0.0
        %1267 = vmatpush2.msra.mxu0 0.0
        %1268 = vmatprep.subr.mxu0 0.0
        %1269 = vmatpush2.msra.mxu0 0.0
        %1270 = vmatprep.subr.mxu0 0.0
        %1271 = vmatpush2.msra.mxu0 0.0
        %1272 = vmatprep.subr.mxu0 0.0
        %1273 = vmatpush2.msra.mxu0 0.0
        %1274 = vmatprep.subr.mxu0 0.0
        %1275 = vmatpush2.msra.mxu0 0.0
        %1276 = vmatprep.subr.mxu0 0.0
        %1277 = vmatpush2.msra.mxu0 0.0
        %1278 = vmatprep.subr.mxu0 0.0
        %1279 = vmatpush2.msra.mxu0 0.0
        %1280 = vmatprep.subr.mxu0 0.0
        %1281 = vmatpush2.msra.mxu0 0.0
        %1282 = vmatprep.subr.mxu0 0.0
        %1283 = vmatpush2.msra.mxu0 0.0
        %1284 = vmatprep.subr.mxu0 0.0
        %1285 = vmatpush2.msra.mxu0 0.0
        %1286 = vmatprep.subr.mxu0 0.0
        %1287 = vmatpush2.msra.mxu0 0.0
        %1288 = vmatprep.mubr.f32.mxu0 0.0
        %1289 = vmatmul.mubr.f32.gmra.mxu0 %v596
        %v1290 = vpop.f32.mrf.mxu0
        %v1291 = vadd.f32 0.0, %v1290
        %v1292 = vpop.f32.mrf.mxu0
        %v1293 = vadd.f32 0.0, %v1292
        %1294 = vmatprep.mubr.f32.mxu0 0.0
        %1295 = vmatmul.mubr.f32.gmra.mxu0 %v599
        %v1296 = vpop.f32.mrf.mxu0
        %v1297 = vadd.f32 0.0, %v1296
        %v1298 = vpop.f32.mrf.mxu0
        %v1299 = vadd.f32 0.0, %v1298
        %1300 = vmatprep.mubr.f32.mxu0 0.0
        %1301 = vmatmul.mubr.f32.gmra.mxu0 %v602
        %v1302 = vpop.f32.mrf.mxu0
        %v1303 = vadd.f32 0.0, %v1302
        %v1304 = vpop.f32.mrf.mxu0
        %v1305 = vadd.f32 0.0, %v1304
        %1306 = vmatprep.mubr.f32.mxu0 0.0
        %1307 = vmatmul.mubr.f32.gmra.mxu0 %v605
        %v1308 = vpop.f32.mrf.mxu0
        %v1309 = vadd.f32 0.0, %v1308
        %v1310 = vpop.f32.mrf.mxu0
        %v1311 = vadd.f32 0.0, %v1310
        %1312 = vdwg.mxu0
        %v1313 = vsub.f32 %v1202, %v1216
        %v1314 = vsub.f32 %v1208, %v1222
        %v1315 = vadd.f32 %v1204, %v1214
        %v1316 = vadd.f32 %v1210, %v1220
        %v1317 = vsub.f32 %v1291, %v1305
        %v1318 = vsub.f32 %v1297, %v1311
        %v1319 = vadd.f32 %v1293, %v1303
        %v1320 = vadd.f32 %v1299, %v1309
        %v1321 = vmul.f32 %v1313, %v1313
        %v1322 = vmul.f32 %v1314, %v1314
        %v1323 = vmul.f32 %v1315, %v1315
        %v1324 = vmul.f32 %v1316, %v1316
        %v1325 = vadd.f32 %v1321, %v1323
        %v1326 = vadd.f32 %v1322, %v1324
        %v1327 = vmul.f32 %v1317, %v1317
        %v1328 = vmul.f32 %v1318, %v1318
        %v1329 = vmul.f32 %v1319, %v1319
        %v1330 = vmul.f32 %v1320, %v1320
        %v1331 = vadd.f32 %v1327, %v1329
        %v1332 = vadd.f32 %v1328, %v1330
        %v1333 = vrsqrt.pop %v1325
        %v1334 = vmul.f32 %v1325, %v1333
        %vm1335 = vcmp.eq.f32.partialorder %v1325, inf
        %v1336 = vsel %vm1335, %v1325, %v1334
        %vm1337 = vcmp.eq.f32.partialorder %v1325, 0.0
        %v1338 = vand.u32 %v1325, 2147483648
        %v1339 = vsel %vm1337, %v1338, %v1336
        %v1340 = vrsqrt.pop %v1326
        %v1341 = vmul.f32 %v1326, %v1340
        %vm1342 = vcmp.eq.f32.partialorder %v1326, inf
        %v1343 = vsel %vm1342, %v1326, %v1341
        %vm1344 = vcmp.eq.f32.partialorder %v1326, 0.0
        %v1345 = vand.u32 %v1326, 2147483648
        %v1346 = vsel %vm1344, %v1345, %v1343
        %v1347 = vrsqrt.pop %v1331
        %v1348 = vmul.f32 %v1331, %v1347
        %vm1349 = vcmp.eq.f32.partialorder %v1331, inf
        %v1350 = vsel %vm1349, %v1331, %v1348
        %vm1351 = vcmp.eq.f32.partialorder %v1331, 0.0
        %v1352 = vand.u32 %v1331, 2147483648
        %v1353 = vsel %vm1351, %v1352, %v1350
        %v1354 = vrsqrt.pop %v1332
        %v1355 = vmul.f32 %v1332, %v1354
        %vm1356 = vcmp.eq.f32.partialorder %v1332, inf
        %v1357 = vsel %vm1356, %v1332, %v1355
        %vm1358 = vcmp.eq.f32.partialorder %v1332, 0.0
        %v1359 = vand.u32 %v1332, 2147483648
        %v1360 = vsel %vm1358, %v1359, %v1357
        %v1361 = vsub.f32 %v1339, %v1353
        %v1362 = vsub.f32 %v1346, %v1360
        %v1363 = vand.u32 2147483647, %v1361
        %v1364 = vand.u32 2147483647, %v1362
        %v1365 = vmul.f32 %v1313, %v1317
        %v1366 = vmul.f32 %v1314, %v1318
        %v1367 = vmul.f32 %v1315, %v1319
        %v1368 = vmul.f32 %v1316, %v1320
        %v1369 = vadd.f32 %v1365, %v1367
        %v1370 = vadd.f32 %v1366, %v1368
        %v1371 = vadd.f32 %v1325, 1e-12
        %v1372 = vadd.f32 %v1326, 1e-12
        %v1373 = vrsqrt.pop %v1371
        %v1374 = vrsqrt.pop %v1372
        %v1375 = vmul.f32 %v1369, %v1373
        %v1376 = vmul.f32 %v1370, %v1374
        %v1377 = vadd.f32 %v1331, 1e-12
        %v1378 = vadd.f32 %v1332, 1e-12
        %v1379 = vrsqrt.pop %v1377
        %v1380 = vrsqrt.pop %v1378
        %v1381 = vmul.f32 %v1375, %v1379
        %v1382 = vmul.f32 %v1376, %v1380
        %v1383 = vadd.f32 %v1363, %v1364
        %v1384 = vrot.slane %v1383, 4
        %v1385 = vadd.f32 %v1383, %v1384
        %v1386 = vrot.slane %v1385, 2
        %v1387 = vadd.f32 %v1385, %v1386
        %v1388 = vrot.slane %v1387, 1
        %v1389 = vadd.f32 %v1387, %v1388
        %v1390 = vadd.f32 %v1126, %v1389
        %v1391 = vadd.f32 %v1381, %v1382
        %v1392 = vrot.slane %v1391, 4
        %v1393 = vadd.f32 %v1391, %v1392
        %v1394 = vrot.slane %v1393, 2
        %v1395 = vadd.f32 %v1393, %v1394
        %v1396 = vrot.slane %v1395, 1
        %v1397 = vadd.f32 %v1395, %v1396
        %v1398 = vadd.f32 %v1134, %v1397
        %1399 = vmatprep.subr.mxu0 0.0
        %1400 = vmatpush1.msra.mxu0 0.0
        %1401 = vmatprep.subr.mxu0 0.0
        %1402 = vmatpush1.msra.mxu0 0.0
        %1403 = vmatprep.subr.mxu0 0.0
        %1404 = vmatpush1.msra.mxu0 0.0
        %1405 = vmatprep.subr.mxu0 0.0
        %1406 = vmatpush1.msra.mxu0 0.0
        %1407 = vmatprep.subr.mxu0 0.0
        %1408 = vmatpush1.msra.mxu0 0.0
        %1409 = vmatprep.subr.mxu0 0.0
        %1410 = vmatpush1.msra.mxu0 0.0
        %1411 = vmatprep.subr.mxu0 0.0
        %1412 = vmatpush1.msra.mxu0 0.0
        %1413 = vmatprep.subr.mxu0 0.0
        %1414 = vmatpush1.msra.mxu0 0.0
        %1415 = vmatprep.subr.mxu0 0.0
        %1416 = vmatpush1.msra.mxu0 0.0
        %1417 = vmatprep.subr.mxu0 0.0
        %1418 = vmatpush1.msra.mxu0 0.0
        %1419 = vmatprep.subr.mxu0 0.0
        %1420 = vmatpush1.msra.mxu0 0.0
        %1421 = vmatprep.subr.mxu0 0.0
        %1422 = vmatpush1.msra.mxu0 0.0
        %1423 = vmatprep.subr.mxu0 0.0
        %1424 = vmatpush1.msra.mxu0 0.0
        %1425 = vmatprep.subr.mxu0 0.0
        %1426 = vmatpush1.msra.mxu0 0.0
        %1427 = vmatprep.subr.mxu0 %v448
        %1428 = vmatpush1.msra.mxu0 %v446
        %1429 = vmatprep.subr.mxu0 %v442
        %1430 = vmatpush1.msra.mxu0 %v440
        %1431 = vmatprep.subr.mxu0 0.0
        %1432 = vmatpush2.msra.mxu0 0.0
        %1433 = vmatprep.subr.mxu0 0.0
        %1434 = vmatpush2.msra.mxu0 0.0
        %1435 = vmatprep.subr.mxu0 0.0
        %1436 = vmatpush2.msra.mxu0 0.0
        %1437 = vmatprep.subr.mxu0 0.0
        %1438 = vmatpush2.msra.mxu0 0.0
        %1439 = vmatprep.subr.mxu0 0.0
        %1440 = vmatpush2.msra.mxu0 0.0
        %1441 = vmatprep.subr.mxu0 0.0
        %1442 = vmatpush2.msra.mxu0 0.0
        %1443 = vmatprep.subr.mxu0 0.0
        %1444 = vmatpush2.msra.mxu0 0.0
        %1445 = vmatprep.subr.mxu0 0.0
        %1446 = vmatpush2.msra.mxu0 0.0
        %1447 = vmatprep.subr.mxu0 0.0
        %1448 = vmatpush2.msra.mxu0 0.0
        %1449 = vmatprep.subr.mxu0 0.0
        %1450 = vmatpush2.msra.mxu0 0.0
        %1451 = vmatprep.subr.mxu0 0.0
        %1452 = vmatpush2.msra.mxu0 0.0
        %1453 = vmatprep.subr.mxu0 0.0
        %1454 = vmatpush2.msra.mxu0 0.0
        %1455 = vmatprep.subr.mxu0 0.0
        %1456 = vmatpush2.msra.mxu0 0.0
        %1457 = vmatprep.subr.mxu0 0.0
        %1458 = vmatpush2.msra.mxu0 0.0
        %1459 = vmatprep.subr.mxu0 0.0
        %1460 = vmatpush2.msra.mxu0 0.0
        %1461 = vmatprep.subr.mxu0 0.0
        %1462 = vmatpush2.msra.mxu0 0.0
        %1463 = vmatprep.mubr.f32.mxu0 0.0
        %1464 = vmatmul.mubr.f32.gmra.mxu0 %v596
        %v1465 = vpop.f32.mrf.mxu0
        %v1466 = vadd.f32 0.0, %v1465
        %v1467 = vpop.f32.mrf.mxu0
        %v1468 = vadd.f32 0.0, %v1467
        %1469 = vmatprep.mubr.f32.mxu0 0.0
        %1470 = vmatmul.mubr.f32.gmra.mxu0 %v599
        %v1471 = vpop.f32.mrf.mxu0
        %v1472 = vadd.f32 0.0, %v1471
        %v1473 = vpop.f32.mrf.mxu0
        %v1474 = vadd.f32 0.0, %v1473
        %1475 = vmatprep.mubr.f32.mxu0 0.0
        %1476 = vmatmul.mubr.f32.gmra.mxu0 %v602
        %v1477 = vpop.f32.mrf.mxu0
        %v1478 = vadd.f32 0.0, %v1477
        %v1479 = vpop.f32.mrf.mxu0
        %v1480 = vadd.f32 0.0, %v1479
        %1481 = vmatprep.mubr.f32.mxu0 0.0
        %1482 = vmatmul.mubr.f32.gmra.mxu0 %v605
        %v1483 = vpop.f32.mrf.mxu0
        %v1484 = vadd.f32 0.0, %v1483
        %v1485 = vpop.f32.mrf.mxu0
        %v1486 = vadd.f32 0.0, %v1485
        %1487 = vdwg.mxu0
        %1488 = vmatprep.subr.mxu0 0.0
        %1489 = vmatpush1.msra.mxu0 0.0
        %1490 = vmatprep.subr.mxu0 0.0
        %1491 = vmatpush1.msra.mxu0 0.0
        %1492 = vmatprep.subr.mxu0 0.0
        %1493 = vmatpush1.msra.mxu0 0.0
        %1494 = vmatprep.subr.mxu0 0.0
        %1495 = vmatpush1.msra.mxu0 0.0
        %1496 = vmatprep.subr.mxu0 0.0
        %1497 = vmatpush1.msra.mxu0 0.0
        %1498 = vmatprep.subr.mxu0 0.0
        %1499 = vmatpush1.msra.mxu0 0.0
        %1500 = vmatprep.subr.mxu0 0.0
        %1501 = vmatpush1.msra.mxu0 0.0
        %1502 = vmatprep.subr.mxu0 0.0
        %1503 = vmatpush1.msra.mxu0 0.0
        %1504 = vmatprep.subr.mxu0 0.0
        %1505 = vmatpush1.msra.mxu0 0.0
        %1506 = vmatprep.subr.mxu0 0.0
        %1507 = vmatpush1.msra.mxu0 0.0
        %1508 = vmatprep.subr.mxu0 0.0
        %1509 = vmatpush1.msra.mxu0 0.0
        %1510 = vmatprep.subr.mxu0 0.0
        %1511 = vmatpush1.msra.mxu0 0.0
        %1512 = vmatprep.subr.mxu0 0.0
        %1513 = vmatpush1.msra.mxu0 0.0
        %1514 = vmatprep.subr.mxu0 0.0
        %1515 = vmatpush1.msra.mxu0 0.0
        %1516 = vmatprep.subr.mxu0 %v593
        %1517 = vmatpush1.msra.mxu0 %v591
        %1518 = vmatprep.subr.mxu0 %v587
        %1519 = vmatpush1.msra.mxu0 %v585
        %1520 = vmatprep.subr.mxu0 0.0
        %1521 = vmatpush2.msra.mxu0 0.0
        %1522 = vmatprep.subr.mxu0 0.0
        %1523 = vmatpush2.msra.mxu0 0.0
        %1524 = vmatprep.subr.mxu0 0.0
        %1525 = vmatpush2.msra.mxu0 0.0
        %1526 = vmatprep.subr.mxu0 0.0
        %1527 = vmatpush2.msra.mxu0 0.0
        %1528 = vmatprep.subr.mxu0 0.0
        %1529 = vmatpush2.msra.mxu0 0.0
        %1530 = vmatprep.subr.mxu0 0.0
        %1531 = vmatpush2.msra.mxu0 0.0
        %1532 = vmatprep.subr.mxu0 0.0
        %1533 = vmatpush2.msra.mxu0 0.0
        %1534 = vmatprep.subr.mxu0 0.0
        %1535 = vmatpush2.msra.mxu0 0.0
        %1536 = vmatprep.subr.mxu0 0.0
        %1537 = vmatpush2.msra.mxu0 0.0
        %1538 = vmatprep.subr.mxu0 0.0
        %1539 = vmatpush2.msra.mxu0 0.0
        %1540 = vmatprep.subr.mxu0 0.0
        %1541 = vmatpush2.msra.mxu0 0.0
        %1542 = vmatprep.subr.mxu0 0.0
        %1543 = vmatpush2.msra.mxu0 0.0
        %1544 = vmatprep.subr.mxu0 0.0
        %1545 = vmatpush2.msra.mxu0 0.0
        %1546 = vmatprep.subr.mxu0 0.0
        %1547 = vmatpush2.msra.mxu0 0.0
        %1548 = vmatprep.subr.mxu0 0.0
        %1549 = vmatpush2.msra.mxu0 0.0
        %1550 = vmatprep.subr.mxu0 0.0
        %1551 = vmatpush2.msra.mxu0 0.0
        %1552 = vmatprep.mubr.f32.mxu0 0.0
        %1553 = vmatmul.mubr.f32.gmra.mxu0 %v596
        %v1554 = vpop.f32.mrf.mxu0
        %v1555 = vadd.f32 0.0, %v1554
        %v1556 = vpop.f32.mrf.mxu0
        %v1557 = vadd.f32 0.0, %v1556
        %1558 = vmatprep.mubr.f32.mxu0 0.0
        %1559 = vmatmul.mubr.f32.gmra.mxu0 %v599
        %v1560 = vpop.f32.mrf.mxu0
        %v1561 = vadd.f32 0.0, %v1560
        %v1562 = vpop.f32.mrf.mxu0
        %v1563 = vadd.f32 0.0, %v1562
        %1564 = vmatprep.mubr.f32.mxu0 0.0
        %1565 = vmatmul.mubr.f32.gmra.mxu0 %v602
        %v1566 = vpop.f32.mrf.mxu0
        %v1567 = vadd.f32 0.0, %v1566
        %v1568 = vpop.f32.mrf.mxu0
        %v1569 = vadd.f32 0.0, %v1568
        %1570 = vmatprep.mubr.f32.mxu0 0.0
        %1571 = vmatmul.mubr.f32.gmra.mxu0 %v605
        %v1572 = vpop.f32.mrf.mxu0
        %v1573 = vadd.f32 0.0, %v1572
        %v1574 = vpop.f32.mrf.mxu0
        %v1575 = vadd.f32 0.0, %v1574
        %1576 = vdwg.mxu0
        %v1577 = vsub.f32 %v1466, %v1480
        %v1578 = vsub.f32 %v1472, %v1486
        %v1579 = vadd.f32 %v1468, %v1478
        %v1580 = vadd.f32 %v1474, %v1484
        %v1581 = vsub.f32 %v1555, %v1569
        %v1582 = vsub.f32 %v1561, %v1575
        %v1583 = vadd.f32 %v1557, %v1567
        %v1584 = vadd.f32 %v1563, %v1573
        %v1585 = vmul.f32 %v1577, %v1577
        %v1586 = vmul.f32 %v1578, %v1578
        %v1587 = vmul.f32 %v1579, %v1579
        %v1588 = vmul.f32 %v1580, %v1580
        %v1589 = vadd.f32 %v1585, %v1587
        %v1590 = vadd.f32 %v1586, %v1588
        %v1591 = vmul.f32 %v1581, %v1581
        %v1592 = vmul.f32 %v1582, %v1582
        %v1593 = vmul.f32 %v1583, %v1583
        %v1594 = vmul.f32 %v1584, %v1584
        %v1595 = vadd.f32 %v1591, %v1593
        %v1596 = vadd.f32 %v1592, %v1594
        %v1597 = vrsqrt.pop %v1589
        %v1598 = vmul.f32 %v1589, %v1597
        %vm1599 = vcmp.eq.f32.partialorder %v1589, inf
        %v1600 = vsel %vm1599, %v1589, %v1598
        %vm1601 = vcmp.eq.f32.partialorder %v1589, 0.0
        %v1602 = vand.u32 %v1589, 2147483648
        %v1603 = vsel %vm1601, %v1602, %v1600
        %v1604 = vrsqrt.pop %v1590
        %v1605 = vmul.f32 %v1590, %v1604
        %vm1606 = vcmp.eq.f32.partialorder %v1590, inf
        %v1607 = vsel %vm1606, %v1590, %v1605
        %vm1608 = vcmp.eq.f32.partialorder %v1590, 0.0
        %v1609 = vand.u32 %v1590, 2147483648
        %v1610 = vsel %vm1608, %v1609, %v1607
        %v1611 = vrsqrt.pop %v1595
        %v1612 = vmul.f32 %v1595, %v1611
        %vm1613 = vcmp.eq.f32.partialorder %v1595, inf
        %v1614 = vsel %vm1613, %v1595, %v1612
        %vm1615 = vcmp.eq.f32.partialorder %v1595, 0.0
        %v1616 = vand.u32 %v1595, 2147483648
        %v1617 = vsel %vm1615, %v1616, %v1614
        %v1618 = vrsqrt.pop %v1596
        %v1619 = vmul.f32 %v1596, %v1618
        %vm1620 = vcmp.eq.f32.partialorder %v1596, inf
        %v1621 = vsel %vm1620, %v1596, %v1619
        %vm1622 = vcmp.eq.f32.partialorder %v1596, 0.0
        %v1623 = vand.u32 %v1596, 2147483648
        %v1624 = vsel %vm1622, %v1623, %v1621
        %v1625 = vsub.f32 %v1603, %v1617
        %v1626 = vsub.f32 %v1610, %v1624
        %v1627 = vand.u32 2147483647, %v1625
        %v1628 = vand.u32 2147483647, %v1626
        %v1629 = vmul.f32 %v1577, %v1581
        %v1630 = vmul.f32 %v1578, %v1582
        %v1631 = vmul.f32 %v1579, %v1583
        %v1632 = vmul.f32 %v1580, %v1584
        %v1633 = vadd.f32 %v1629, %v1631
        %v1634 = vadd.f32 %v1630, %v1632
        %v1635 = vadd.f32 %v1589, 1e-12
        %v1636 = vadd.f32 %v1590, 1e-12
        %v1637 = vrsqrt.pop %v1635
        %v1638 = vrsqrt.pop %v1636
        %v1639 = vmul.f32 %v1633, %v1637
        %v1640 = vmul.f32 %v1634, %v1638
        %v1641 = vadd.f32 %v1595, 1e-12
        %v1642 = vadd.f32 %v1596, 1e-12
        %v1643 = vrsqrt.pop %v1641
        %v1644 = vrsqrt.pop %v1642
        %v1645 = vmul.f32 %v1639, %v1643
        %v1646 = vmul.f32 %v1640, %v1644
        %v1647 = vadd.f32 %v1627, %v1628
        %v1648 = vrot.slane %v1647, 4
        %v1649 = vadd.f32 %v1647, %v1648
        %v1650 = vrot.slane %v1649, 2
        %v1651 = vadd.f32 %v1649, %v1650
        %v1652 = vrot.slane %v1651, 1
        %v1653 = vadd.f32 %v1651, %v1652
        %v1654 = vadd.f32 %v1390, %v1653
        %v1655 = vadd.f32 %v1645, %v1646
        %v1656 = vrot.slane %v1655, 4
        %v1657 = vadd.f32 %v1655, %v1656
        %v1658 = vrot.slane %v1657, 2
        %v1659 = vadd.f32 %v1657, %v1658
        %v1660 = vrot.slane %v1659, 1
        %v1661 = vadd.f32 %v1659, %v1660
        %v1662 = vadd.f32 %v1398, %v1661
        %1663 = vst [vmem:[%s287] sm:$0x1] %v1654
        %1664 = vst [vmem:[%s293] sm:$0x1] %v1662
        %s1665 = sand.u32 %s131, 1
        %s1666 = scalar_lea.sflag [#allocation4], %s1665
        %s1667 = sand.u32 %s131, 1
        %s1668 = scalar_lea.vmem [#allocation7], %s1667
        %s1669 = sand.u32 %s157, 1
        %s1670 = scalar_lea.sflag [#allocation9], %s1669
        %s1671 = sand.u32 %s157, 1
        %s1672 = scalar_lea.vmem [#allocation8], %s1671
        // Predicated region
        $region45: #{tpu_custom_call.1} parent=35 // pred_check
          %p1673 = pneg %p141
        $region46: #{tpu_custom_call.1} parent=35 // pred_check_branch
          %1675 = sbr.rel (%p1673) target = $region48
        $region47: #{tpu_custom_call.1} parent=35 // pred_region
          %s1677 = ssub.s32 16, 16
          %1678 = vsyncadd %s1666, %s1677
          %s1679 = smul.addr %s29, 16
          %s1680 = scalar_lea.hbm %s4, %s1679
          %s1682 = sshll.u32 %s1668, 4
          %s1683 = int_to_ptr.vmem [resolvable:$true] %s1682
          %1685 = dma.vmem_to_hbm [thread:$0]  %s1683, 16, %s1680, %s1666
        $region48: #{tpu_custom_call.1} parent=35 // pred_fallthru
          _
        // Predicated region
        $region49: #{tpu_custom_call.1} parent=35 // pred_check
          %p1686 = pneg %p167
        $region50: #{tpu_custom_call.1} parent=35 // pred_check_branch
          %1688 = sbr.rel (%p1686) target = $region52
        $region51: #{tpu_custom_call.1} parent=35 // pred_region
          %s1690 = ssub.s32 16, 16
          %1691 = vsyncadd %s1670, %s1690
          %s1692 = smul.addr %s29, 16
          %s1693 = scalar_lea.hbm %s5, %s1692
          %s1695 = sshll.u32 %s1672, 4
          %s1696 = int_to_ptr.vmem [resolvable:$true] %s1695
          %1698 = dma.vmem_to_hbm [thread:$0]  %s1696, 16, %s1693, %s1670
        $region52: #{tpu_custom_call.1} parent=35 // pred_fallthru
          _
      $region36: #{tpu_custom_call.1} parent=5 // pred_fallthru
        _
      %p1699 = scmp.le.s32.totalorder 2, %s24
      // Predicated region
      $region53: #{tpu_custom_call.1} parent=5 // pred_check
        %p1700 = pneg %p1699
      $region54: #{tpu_custom_call.1} parent=5 // pred_check_branch
        %1702 = sbr.rel (%p1700) target = $region56
      $region55: #{tpu_custom_call.1} parent=5 // pred_region
        %s1703 = ssub.s32 %s24, 2
        // Predicated region
        $region57: #{tpu_custom_call.1} parent=55 // pred_check
          %p1704 = pneg %p147
        $region58: #{tpu_custom_call.1} parent=55 // pred_check_branch
          %1706 = sbr.rel (%p1704) target = $region60
        $region59: #{tpu_custom_call.1} parent=55 // pred_region
          %s1707 = sand.u32 %s132, 1
          %s1708 = scalar_lea.sflag [#allocation4], %s1707
          %s1709 = sand.u32 %s132, 1
          %s1710 = scalar_lea.vmem [#allocation7], %s1709
          %1711 = dma.done %s1708, 16
        $region60: #{tpu_custom_call.1} parent=55 // pred_fallthru
          _
        // Predicated region
        $region61: #{tpu_custom_call.1} parent=55 // pred_check
          %p1712 = pneg %p173
        $region62: #{tpu_custom_call.1} parent=55 // pred_check_branch
          %1714 = sbr.rel (%p1712) target = $region64
        $region63: #{tpu_custom_call.1} parent=55 // pred_region
          %s1715 = sand.u32 %s158, 1
          %s1716 = scalar_lea.sflag [#allocation9], %s1715
          %s1717 = sand.u32 %s158, 1
          %s1718 = scalar_lea.vmem [#allocation8], %s1717
          %1719 = dma.done %s1716, 16
        $region64: #{tpu_custom_call.1} parent=55 // pred_fallthru
          _
      $region56: #{tpu_custom_call.1} parent=5 // pred_fallthru
        _
    $region6: #{tpu_custom_call.1} parent=1 // loop_footer
      %s28 = sadd.s32 1, %s24
    $region7: #{tpu_custom_call.1} parent=1 // loop_footer_branch
      %23 = sbr.rel target = $region3
    $region8: #{tpu_custom_call.1} parent=1 // loop_exit
      _
    %1720 = vsyncpa [#allocation3], 1
    %s1721 = scalar_lea.sflag [#allocation3], 1
    %1722 = vsyncpa %s1721, 1
    %1723 = vsyncpa [#allocation6], 1
    %s1724 = scalar_lea.sflag [#allocation6], 1
    %1725 = vsyncpa %s1724, 1
    %1726 = vsyncpa [#allocation4], 1
    %s1727 = scalar_lea.sflag [#allocation4], 1
    %1728 = vsyncpa %s1727, 1
    %1729 = vsyncpa [#allocation9], 1
    %s1730 = scalar_lea.sflag [#allocation9], 1
    %1731 = vsyncpa %s1730, 1

</llo_original>
